<compile_context>
chip_gen: v6e
topology: v6e:2x2x1
jax: 0.10.0
libtpu: 0.0.40
codegen_flags: <defaults>
</compile_context>

<pallas_src>
import functools

import jax
import jax.numpy as jnp
from jax.experimental import pallas as pl
from jax.experimental.pallas import tpu as pltpu

# ---- static config (small, consistent with the module's forward) ----
C_IN, H_IMG, W_IMG = 4, 16, 16
NUM_FEATURES = 32          # backbone output width (self.num_features)
PROJ_HIDDEN = 64           # projector hidden width  (proj_mlp stand-in: "32-64-16")
PROJ_OUT = 16              # projector output width
BN_EPS = 1e-5
TAU = 1.0
MULTIPLIER = 2
LARGE_NUMBER = 1.0e9


# ---------------------------------------------------------------------------
# Fused forward kernel:
#   im2col conv matmul -> bias+ReLU -> GAP (matmul) -> Linear -> per-view BN
#   -> ReLU -> Linear -> NT-Xent loss (scalar out).
# TODO(synk): the real ConvBackbone arch (e.g. a ResNet) is unspecified; a single
# 3x3 conv + ReLU + global-average-pool block stands in, keeping the
# (B, num_features) output contract.
# ---------------------------------------------------------------------------
def simclr_fused_kernel(patches_ref, convw_ref, convb_ref,
                        w1_ref, b1_ref, g1_ref, be1_ref, w2_ref, b2_ref,
                        loss_ref, *, batch_per_view, hw, tau, multiplier):
    n = 2 * batch_per_view          # rows after concatenating the two views
    npix = n * hw

    # ---- backbone: 3x3 conv as ONE im2col matmul (K = 9*Cin), bias + ReLU ----
    # Kept (features, pixels) so the large intermediate is lane-dense.
    conv = jnp.dot(convw_ref[...], patches_ref[...],
                   preferred_element_type=jnp.float32)               # (F, n*H*W)
    conv = jnp.maximum(conv + convb_ref[...], 0.0)

    # ---- global average pool as a matmul (otherwise-idle MXU, no XLU reshuffle) ----
    pr = jax.lax.broadcasted_iota(jnp.int32, (n, npix), 0)
    pc = jax.lax.broadcasted_iota(jnp.int32, (n, npix), 1)
    pool = jnp.where((pc >= pr * hw) & (pc < (pr + 1) * hw), 1.0 / hw, 0.0)
    feat = jax.lax.dot_general(pool, conv, (((1,), (1,)), ((), ())),
                               preferred_element_type=jnp.float32)   # (n, F)

    # ---- projector: Linear -> per-view BatchNorm (train stats) -> ReLU -> Linear ----
    h = jnp.dot(feat, w1_ref[...], preferred_element_type=jnp.float32) + b1_ref[...]
    rows = jax.lax.broadcasted_iota(jnp.int32, (n, 1), 0)
    is_y = rows >= batch_per_view                  # rows belonging to the 2nd view
    wx = jnp.where(is_y, 0.0, 1.0)                 # (n,1) mask for view x
    wy = 1.0 - wx
    inv_b = 1.0 / batch_per_view
    mu_x = jnp.sum(h * wx, axis=0, keepdims=True) * inv_b
    mu_y = jnp.sum(h * wy, axis=0, keepdims=True) * inv_b
    mu = jnp.where(is_y, mu_y, mu_x)               # per-row mean of that row's view
    cen = h - mu
    var_x = jnp.sum(cen * cen * wx, axis=0, keepdims=True) * inv_b   # biased var (BN train)
    var_y = jnp.sum(cen * cen * wy, axis=0, keepdims=True) * inv_b
    var = jnp.where(is_y, var_y, var_x)
    hbn = cen * jax.lax.rsqrt(var + BN_EPS)
    hbn = jnp.maximum(hbn * g1_ref[...] + be1_ref[...], 0.0)
    z = jnp.dot(hbn, w2_ref[...], preferred_element_type=jnp.float32) + b2_ref[...]

    # ---- NT-Xent loss ----
    # TODO(synk): at production batch sizes (n >= 2048) this (n,n) block must be
    # row-tiled with an online log-sum-exp (flash-style) and a "parallel" grid
    # axis + vmem_limit_bytes (mandatory on v7x's 64 MiB VMEM); at n=4 a single
    # un-gridded tile is optimal, so no grid / dimension_semantics are needed.
    norm = jnp.sqrt(jnp.sum(z * z, axis=1, keepdims=True))
    zn = z / jnp.maximum(norm, 1e-12) * (1.0 / (tau ** 0.5))         # F.normalize eps
    logits = jax.lax.dot_general(zn, zn, (((1,), (1,)), ((), ())),
                                 preferred_element_type=jnp.float32)  # (n, n) = z @ z.T
    r = jax.lax.broadcasted_iota(jnp.int32, (n, n), 0)
    col = jax.lax.broadcasted_iota(jnp.int32, (n, n), 1)
    logits = jnp.where(r == col, -LARGE_NUMBER, logits)              # kill self-similarity
    mx = jnp.max(logits, axis=1, keepdims=True)
    lse = mx + jnp.log(jnp.sum(jnp.exp(logits - mx), axis=1, keepdims=True))
    logprob = logits - lse
    # positives of row i sit at columns (i + k*n/m) % n; reuse the iotas above
    # (per-tile index math — no extra O(n^2) iota/mask per k).
    acc = jnp.float32(0.0)
    for k in range(1, multiplier):
        tgt = r + k * (n // multiplier)
        tgt = jnp.where(tgt >= n, tgt - n, tgt)                      # (r + shift) mod n
        acc = acc + jnp.sum(jnp.where(col == tgt, logprob, 0.0))
    loss_ref[0, 0] = -acc / (n * (multiplier - 1))


# ---------------------------------------------------------------------------
# Wrapper (layout glue + the single pallas_call)
# ---------------------------------------------------------------------------
def _im2col_tr(img_nchw):
    """NCHW image -> transposed 3x3/stride-1/pad-1 patch matrix (9*Cin, N*H*W).

    TODO(synk): at production image sizes the halo handling / im2col should move
    inside a gridded conv kernel instead of materializing 9x the input in HBM;
    at 16x16x4 inputs this prep is noise and XLA fuses it into a couple of ops.
    """
    N = img_nchw.shape[0]
    img = jnp.transpose(img_nchw, (0, 2, 3, 1))                      # NCHW -> NHWC
    img = jnp.pad(img, ((0, 0), (1, 1), (1, 1), (0, 0)))             # pad=1 for 3x3 conv
    taps = [img[:, kh:kh + H_IMG, kw:kw + W_IMG, :]
            for kh in range(3) for kw in range(3)]
    patches = jnp.stack(taps, axis=3)                                # (N, H, W, 9, Cin)
    return patches.reshape(N * H_IMG * W_IMG, 9 * C_IN).T            # (9*Cin, N*H*W)


@jax.jit
def simclr_forward(x_nchw, y_nchw, params):
    B = x_nchw.shape[0]
    imgs = jnp.concatenate([x_nchw, y_nchw], axis=0)                 # both views, one pass
    patches_t = _im2col_tr(imgs)                                     # (36, 2B*H*W)
    convw_t = params["conv_w"].reshape(9 * C_IN, NUM_FEATURES).T     # (F, 36)
    convb_t = params["conv_b"].T                                     # (F, 1)

    kernel = functools.partial(simclr_fused_kernel,
                               batch_per_view=B, hw=H_IMG * W_IMG,
                               tau=TAU, multiplier=MULTIPLIER)
    loss = pl.pallas_call(
        kernel,
        out_shape=jax.ShapeDtypeStruct((1, 1), jnp.float32),
        out_specs=pl.BlockSpec(memory_space=pltpu.MemorySpace.SMEM),
    )(patches_t, convw_t, convb_t,
      params["w1"], params["b1"], params["g1"], params["be1"],
      params["w2"], params["b2"])
    return loss[0, 0]


# ---------------------------------------------------------------------------
# Pure-JAX reference (mirrors the module semantics) for correctness checking
# ---------------------------------------------------------------------------
def _ref_forward(x_nchw, y_nchw, params):
    hp = jax.lax.Precision.HIGHEST

    def backbone(img_nchw):
        img = jnp.transpose(img_nchw, (0, 2, 3, 1))
        img = jnp.pad(img, ((0, 0), (1, 1), (1, 1), (0, 0)))
        B = img.shape[0]
        acc = jnp.zeros((B, H_IMG, W_IMG, NUM_FEATURES), jnp.float32)
        for kh in range(3):
            for kw in range(3):
                patch = img[:, kh:kh + H_IMG, kw:kw + W_IMG, :]
                acc = acc + jnp.einsum("bhwc,cf->bhwf", patch,
                                       params["conv_w"][kh, kw], precision=hp)
        acc = jnp.maximum(acc + params["conv_b"][0], 0.0)
        return acc.mean(axis=(1, 2))                                 # (B, F)

    def head(feat):
        h = jnp.dot(feat, params["w1"], precision=hp) + params["b1"]
        mu = h.mean(axis=0, keepdims=True)
        var = ((h - mu) ** 2).mean(axis=0, keepdims=True)
        h = (h - mu) / jnp.sqrt(var + BN_EPS)
        h = jnp.maximum(h * params["g1"] + params["be1"], 0.0)
        return jnp.dot(h, params["w2"], precision=hp) + params["b2"]

    z = jnp.concatenate([head(backbone(x_nchw)), head(backbone(y_nchw))], axis=0)
    n = z.shape[0]
    z = z / jnp.maximum(jnp.linalg.norm(z, axis=1, keepdims=True), 1e-12) / (TAU ** 0.5)
    logits = jnp.dot(z, z.T, precision=hp)
    logits = jnp.where(jnp.eye(n, dtype=bool), -LARGE_NUMBER, logits)
    logprob = jax.nn.log_softmax(logits, axis=1)
    idx = jnp.arange(n)
    labels = (idx + n // MULTIPLIER) % n
    return -logprob[idx, labels].sum() / n / (MULTIPLIER - 1)


if __name__ == "__main__":
    key = jax.random.PRNGKey(0)
    ks = jax.random.split(key, 9)
    x = jax.random.normal(ks[0], (2, C_IN, H_IMG, W_IMG), jnp.float32)
    y = jax.random.normal(ks[1], (2, C_IN, H_IMG, W_IMG), jnp.float32)
    params = {
        "conv_w": 0.1 * jax.random.normal(ks[2], (3, 3, C_IN, NUM_FEATURES), jnp.float32),
        "conv_b": 0.1 * jax.random.normal(ks[3], (1, NUM_FEATURES), jnp.float32),
        "w1": 0.1 * jax.random.normal(ks[4], (NUM_FEATURES, PROJ_HIDDEN), jnp.float32),
        "b1": 0.1 * jax.random.normal(ks[5], (1, PROJ_HIDDEN), jnp.float32),
        "g1": 1.0 + 0.1 * jax.random.normal(ks[6], (1, PROJ_HIDDEN), jnp.float32),
        "be1": 0.1 * jax.random.normal(ks[7], (1, PROJ_HIDDEN), jnp.float32),
        "w2": 0.1 * jax.random.normal(ks[8], (PROJ_HIDDEN, PROJ_OUT), jnp.float32),
        "b2": jnp.zeros((1, PROJ_OUT), jnp.float32),
    }

    loss = simclr_forward(x, y, params)
    jax.block_until_ready(loss)

    loss_ref = _ref_forward(x, y, params)
    assert jnp.allclose(loss, loss_ref, rtol=2e-3, atol=2e-3), (loss, loss_ref)

    print("KERNEL_OK")
</pallas_src>

<mosaic_0001>
module attributes {stable_mosaic.version = 11 : i64} {
  func.func @simclr_fused_kernel(%arg0: memref<36x1024xf32, #tpu.memory_space<vmem>>, %arg1: memref<32x36xf32, #tpu.memory_space<vmem>>, %arg2: memref<32x1xf32, #tpu.memory_space<vmem>>, %arg3: memref<32x64xf32, #tpu.memory_space<vmem>>, %arg4: memref<1x64xf32, #tpu.memory_space<vmem>>, %arg5: memref<1x64xf32, #tpu.memory_space<vmem>>, %arg6: memref<1x64xf32, #tpu.memory_space<vmem>>, %arg7: memref<64x16xf32, #tpu.memory_space<vmem>>, %arg8: memref<1x16xf32, #tpu.memory_space<vmem>>, %arg9: memref<1x1xf32, #tpu.memory_space<smem>>) attributes {dimension_semantics = [], scalar_prefetch = 0 : i64, scratch_operands = 0 : i64, tpu.core_type = #tpu.core_type<tc>} {
    %c0 = arith.constant 0 : index
    %c0_0 = arith.constant 0 : index
    %0 = vector.load %arg1[%c0, %c0_0] : memref<32x36xf32, #tpu.memory_space<vmem>>, vector<32x36xf32>
    %c0_1 = arith.constant 0 : index
    %c0_2 = arith.constant 0 : index
    %1 = vector.load %arg0[%c0_1, %c0_2] : memref<36x1024xf32, #tpu.memory_space<vmem>>, vector<36x1024xf32>
    %cst = arith.constant dense<0.000000e+00> : vector<32x1024xf32>
    %2 = tpu.matmul %0, %1, %cst {dimension_numbers = #tpu.dot_dimension_numbers<[1], [0], [0], [1], [0, 0, 1, 1], [], []>} : vector<32x36xf32>, vector<36x1024xf32>, vector<32x1024xf32> -> vector<32x1024xf32>
    %c0_3 = arith.constant 0 : index
    %c0_4 = arith.constant 0 : index
    %3 = vector.load %arg2[%c0_3, %c0_4] : memref<32x1xf32, #tpu.memory_space<vmem>>, vector<32x1xf32>
    %4 = vector.broadcast %3 : vector<32x1xf32> to vector<32x1024xf32>
    %5 = arith.addf %2, %4 : vector<32x1024xf32>
    %cst_5 = arith.constant 0.000000e+00 : f32
    %6 = vector.broadcast %cst_5 : f32 to vector<32x1024xf32>
    %7 = arith.maximumf %5, %6 : vector<32x1024xf32>
    %8 = tpu.iota {dimensions = array<i32: 0>} : vector<4x1024xi32>
    %9 = tpu.iota {dimensions = array<i32: 1>} : vector<4x1024xi32>
    %c256_i32 = arith.constant 256 : i32
    %10 = vector.broadcast %c256_i32 : i32 to vector<4x1024xi32>
    %11 = arith.muli %8, %10 : vector<4x1024xi32>
    %12 = arith.cmpi sge, %9, %11 : vector<4x1024xi32>
    %c1_i32 = arith.constant 1 : i32
    %13 = vector.broadcast %c1_i32 : i32 to vector<4x1024xi32>
    %14 = arith.addi %8, %13 : vector<4x1024xi32>
    %c256_i32_6 = arith.constant 256 : i32
    %15 = vector.broadcast %c256_i32_6 : i32 to vector<4x1024xi32>
    %16 = arith.muli %14, %15 : vector<4x1024xi32>
    %17 = arith.cmpi slt, %9, %16 : vector<4x1024xi32>
    %18 = arith.andi %12, %17 : vector<4x1024xi1>
    %cst_7 = arith.constant 3.906250e-03 : f32
    %cst_8 = arith.constant 0.000000e+00 : f32
    %19 = vector.broadcast %cst_7 : f32 to vector<4x1024xf32>
    %20 = vector.broadcast %cst_8 : f32 to vector<4x1024xf32>
    %21 = arith.select %18, %19, %20 : vector<4x1024xi1>, vector<4x1024xf32>
    %cst_9 = arith.constant dense<0.000000e+00> : vector<4x32xf32>
    %22 = tpu.matmul %21, %7, %cst_9 {dimension_numbers = #tpu.dot_dimension_numbers<[1], [1], [0], [0], [0, 0, 1, 0], [], []>} : vector<4x1024xf32>, vector<32x1024xf32>, vector<4x32xf32> -> vector<4x32xf32>
    %c0_10 = arith.constant 0 : index
    %c0_11 = arith.constant 0 : index
    %23 = vector.load %arg3[%c0_10, %c0_11] : memref<32x64xf32, #tpu.memory_space<vmem>>, vector<32x64xf32>
    %cst_12 = arith.constant dense<0.000000e+00> : vector<4x64xf32>
    %24 = tpu.matmul %22, %23, %cst_12 {dimension_numbers = #tpu.dot_dimension_numbers<[1], [0], [0], [1], [0, 0, 1, 1], [], []>} : vector<4x32xf32>, vector<32x64xf32>, vector<4x64xf32> -> vector<4x64xf32>
    %c0_13 = arith.constant 0 : index
    %c0_14 = arith.constant 0 : index
    %25 = vector.load %arg4[%c0_13, %c0_14] : memref<1x64xf32, #tpu.memory_space<vmem>>, vector<1x64xf32>
    %26 = vector.broadcast %25 : vector<1x64xf32> to vector<4x64xf32>
    %27 = arith.addf %24, %26 : vector<4x64xf32>
    %28 = tpu.iota {dimensions = array<i32: 0>} : vector<4x1xi32>
    %c2_i32 = arith.constant 2 : i32
    %29 = vector.broadcast %c2_i32 : i32 to vector<4x1xi32>
    %30 = arith.cmpi sge, %28, %29 : vector<4x1xi32>
    %cst_15 = arith.constant 0.000000e+00 : f32
    %cst_16 = arith.constant 1.000000e+00 : f32
    %31 = vector.broadcast %cst_15 : f32 to vector<4x1xf32>
    %32 = vector.broadcast %cst_16 : f32 to vector<4x1xf32>
    %33 = arith.select %30, %31, %32 : vector<4x1xi1>, vector<4x1xf32>
    %cst_17 = arith.constant 1.000000e+00 : f32
    %34 = vector.broadcast %cst_17 : f32 to vector<4x1xf32>
    %35 = arith.subf %34, %33 : vector<4x1xf32>
    %36 = vector.broadcast %33 : vector<4x1xf32> to vector<4x64xf32>
    %37 = arith.mulf %27, %36 : vector<4x64xf32>
    %cst_18 = arith.constant dense<0.000000e+00> : vector<64xf32>
    %38 = vector.multi_reduction <add>, %37, %cst_18 [0] : vector<4x64xf32> to vector<64xf32>
    %39 = vector.shape_cast %38 : vector<64xf32> to vector<1x64xf32>
    %cst_19 = arith.constant 5.000000e-01 : f32
    %40 = vector.broadcast %cst_19 : f32 to vector<1x64xf32>
    %41 = arith.mulf %39, %40 : vector<1x64xf32>
    %42 = vector.broadcast %35 : vector<4x1xf32> to vector<4x64xf32>
    %43 = arith.mulf %27, %42 : vector<4x64xf32>
    %cst_20 = arith.constant dense<0.000000e+00> : vector<64xf32>
    %44 = vector.multi_reduction <add>, %43, %cst_20 [0] : vector<4x64xf32> to vector<64xf32>
    %45 = vector.shape_cast %44 : vector<64xf32> to vector<1x64xf32>
    %cst_21 = arith.constant 5.000000e-01 : f32
    %46 = vector.broadcast %cst_21 : f32 to vector<1x64xf32>
    %47 = arith.mulf %45, %46 : vector<1x64xf32>
    %48 = vector.shape_cast %30 : vector<4x1xi1> to vector<4x1xi1>
    %49 = vector.broadcast %48 : vector<4x1xi1> to vector<4x64xi1>
    %50 = vector.shape_cast %47 : vector<1x64xf32> to vector<1x64xf32>
    %51 = vector.broadcast %50 : vector<1x64xf32> to vector<4x64xf32>
    %52 = vector.shape_cast %41 : vector<1x64xf32> to vector<1x64xf32>
    %53 = vector.broadcast %52 : vector<1x64xf32> to vector<4x64xf32>
    %54 = arith.select %49, %51, %53 : vector<4x64xi1>, vector<4x64xf32>
    %55 = arith.subf %27, %54 : vector<4x64xf32>
    %56 = arith.mulf %55, %55 : vector<4x64xf32>
    %57 = vector.broadcast %33 : vector<4x1xf32> to vector<4x64xf32>
    %58 = arith.mulf %56, %57 : vector<4x64xf32>
    %cst_22 = arith.constant dense<0.000000e+00> : vector<64xf32>
    %59 = vector.multi_reduction <add>, %58, %cst_22 [0] : vector<4x64xf32> to vector<64xf32>
    %60 = vector.shape_cast %59 : vector<64xf32> to vector<1x64xf32>
    %cst_23 = arith.constant 5.000000e-01 : f32
    %61 = vector.broadcast %cst_23 : f32 to vector<1x64xf32>
    %62 = arith.mulf %60, %61 : vector<1x64xf32>
    %63 = arith.mulf %55, %55 : vector<4x64xf32>
    %64 = vector.broadcast %35 : vector<4x1xf32> to vector<4x64xf32>
    %65 = arith.mulf %63, %64 : vector<4x64xf32>
    %cst_24 = arith.constant dense<0.000000e+00> : vector<64xf32>
    %66 = vector.multi_reduction <add>, %65, %cst_24 [0] : vector<4x64xf32> to vector<64xf32>
    %67 = vector.shape_cast %66 : vector<64xf32> to vector<1x64xf32>
    %cst_25 = arith.constant 5.000000e-01 : f32
    %68 = vector.broadcast %cst_25 : f32 to vector<1x64xf32>
    %69 = arith.mulf %67, %68 : vector<1x64xf32>
    %70 = vector.shape_cast %30 : vector<4x1xi1> to vector<4x1xi1>
    %71 = vector.broadcast %70 : vector<4x1xi1> to vector<4x64xi1>
    %72 = vector.shape_cast %69 : vector<1x64xf32> to vector<1x64xf32>
    %73 = vector.broadcast %72 : vector<1x64xf32> to vector<4x64xf32>
    %74 = vector.shape_cast %62 : vector<1x64xf32> to vector<1x64xf32>
    %75 = vector.broadcast %74 : vector<1x64xf32> to vector<4x64xf32>
    %76 = arith.select %71, %73, %75 : vector<4x64xi1>, vector<4x64xf32>
    %cst_26 = arith.constant 9.99999974E-6 : f32
    %77 = vector.broadcast %cst_26 : f32 to vector<4x64xf32>
    %78 = arith.addf %76, %77 : vector<4x64xf32>
    %79 = math.rsqrt %78 : vector<4x64xf32>
    %80 = arith.mulf %55, %79 : vector<4x64xf32>
    %c0_27 = arith.constant 0 : index
    %c0_28 = arith.constant 0 : index
    %81 = vector.load %arg5[%c0_27, %c0_28] : memref<1x64xf32, #tpu.memory_space<vmem>>, vector<1x64xf32>
    %82 = vector.broadcast %81 : vector<1x64xf32> to vector<4x64xf32>
    %83 = arith.mulf %80, %82 : vector<4x64xf32>
    %c0_29 = arith.constant 0 : index
    %c0_30 = arith.constant 0 : index
    %84 = vector.load %arg6[%c0_29, %c0_30] : memref<1x64xf32, #tpu.memory_space<vmem>>, vector<1x64xf32>
    %85 = vector.broadcast %84 : vector<1x64xf32> to vector<4x64xf32>
    %86 = arith.addf %83, %85 : vector<4x64xf32>
    %cst_31 = arith.constant 0.000000e+00 : f32
    %87 = vector.broadcast %cst_31 : f32 to vector<4x64xf32>
    %88 = arith.maximumf %86, %87 : vector<4x64xf32>
    %c0_32 = arith.constant 0 : index
    %c0_33 = arith.constant 0 : index
    %89 = vector.load %arg7[%c0_32, %c0_33] : memref<64x16xf32, #tpu.memory_space<vmem>>, vector<64x16xf32>
    %cst_34 = arith.constant dense<0.000000e+00> : vector<4x16xf32>
    %90 = tpu.matmul %88, %89, %cst_34 {dimension_numbers = #tpu.dot_dimension_numbers<[1], [0], [0], [1], [0, 0, 1, 1], [], []>} : vector<4x64xf32>, vector<64x16xf32>, vector<4x16xf32> -> vector<4x16xf32>
    %c0_35 = arith.constant 0 : index
    %c0_36 = arith.constant 0 : index
    %91 = vector.load %arg8[%c0_35, %c0_36] : memref<1x16xf32, #tpu.memory_space<vmem>>, vector<1x16xf32>
    %92 = vector.broadcast %91 : vector<1x16xf32> to vector<4x16xf32>
    %93 = arith.addf %90, %92 : vector<4x16xf32>
    %94 = arith.mulf %93, %93 : vector<4x16xf32>
    %cst_37 = arith.constant dense<0.000000e+00> : vector<4xf32>
    %95 = vector.multi_reduction <add>, %94, %cst_37 [1] : vector<4x16xf32> to vector<4xf32>
    %96 = vector.shape_cast %95 : vector<4xf32> to vector<4x1xf32>
    %97 = math.sqrt %96 : vector<4x1xf32>
    %cst_38 = arith.constant 9.99999996E-13 : f32
    %98 = vector.broadcast %cst_38 : f32 to vector<4x1xf32>
    %99 = arith.maximumf %97, %98 : vector<4x1xf32>
    %100 = vector.broadcast %99 : vector<4x1xf32> to vector<4x16xf32>
    %101 = arith.divf %93, %100 : vector<4x16xf32>
    %cst_39 = arith.constant 1.000000e+00 : f32
    %102 = vector.broadcast %cst_39 : f32 to vector<4x16xf32>
    %103 = arith.mulf %101, %102 : vector<4x16xf32>
    %cst_40 = arith.constant dense<0.000000e+00> : vector<4x4xf32>
    %104 = tpu.matmul %103, %103, %cst_40 {dimension_numbers = #tpu.dot_dimension_numbers<[1], [1], [0], [0], [0, 0, 1, 0], [], []>} : vector<4x16xf32>, vector<4x16xf32>, vector<4x4xf32> -> vector<4x4xf32>
    %105 = tpu.iota {dimensions = array<i32: 0>} : vector<4x4xi32>
    %106 = tpu.iota {dimensions = array<i32: 1>} : vector<4x4xi32>
    %107 = arith.cmpi eq, %105, %106 : vector<4x4xi32>
    %cst_41 = arith.constant -1.000000e+09 : f32
    %108 = vector.broadcast %cst_41 : f32 to vector<4x4xf32>
    %109 = arith.select %107, %108, %104 : vector<4x4xi1>, vector<4x4xf32>
    %cst_42 = arith.constant dense<0xFF800000> : vector<4xf32>
    %110 = vector.multi_reduction <maximumf>, %109, %cst_42 [1] : vector<4x4xf32> to vector<4xf32>
    %111 = vector.shape_cast %110 : vector<4xf32> to vector<4x1xf32>
    %112 = vector.broadcast %111 : vector<4x1xf32> to vector<4x4xf32>
    %113 = arith.subf %109, %112 : vector<4x4xf32>
    %114 = math.exp %113 : vector<4x4xf32>
    %cst_43 = arith.constant dense<0.000000e+00> : vector<4xf32>
    %115 = vector.multi_reduction <add>, %114, %cst_43 [1] : vector<4x4xf32> to vector<4xf32>
    %116 = vector.shape_cast %115 : vector<4xf32> to vector<4x1xf32>
    %117 = math.log %116 : vector<4x1xf32>
    %118 = arith.addf %111, %117 : vector<4x1xf32>
    %119 = vector.broadcast %118 : vector<4x1xf32> to vector<4x4xf32>
    %120 = arith.subf %109, %119 : vector<4x4xf32>
    %c2_i32_44 = arith.constant 2 : i32
    %121 = vector.broadcast %c2_i32_44 : i32 to vector<4x4xi32>
    %122 = arith.addi %105, %121 : vector<4x4xi32>
    %c4_i32 = arith.constant 4 : i32
    %123 = vector.broadcast %c4_i32 : i32 to vector<4x4xi32>
    %124 = arith.cmpi sge, %122, %123 : vector<4x4xi32>
    %c4_i32_45 = arith.constant 4 : i32
    %125 = vector.broadcast %c4_i32_45 : i32 to vector<4x4xi32>
    %126 = arith.subi %122, %125 : vector<4x4xi32>
    %127 = arith.select %124, %126, %122 : vector<4x4xi1>, vector<4x4xi32>
    %128 = arith.cmpi eq, %106, %127 : vector<4x4xi32>
    %cst_46 = arith.constant 0.000000e+00 : f32
    %129 = vector.broadcast %cst_46 : f32 to vector<4x4xf32>
    %130 = arith.select %128, %120, %129 : vector<4x4xi1>, vector<4x4xf32>
    %131 = vector.shape_cast %130 : vector<4x4xf32> to vector<1x4x4xf32>
    %cst_47 = arith.constant dense<0.000000e+00> : vector<1xf32>
    %132 = vector.multi_reduction <add>, %131, %cst_47 [1, 2] : vector<1x4x4xf32> to vector<1xf32>
    %133 = vector.shape_cast %132 : vector<1xf32> to vector<1x1x1xf32>
    %134 = vector.extract %133[0, 0, 0] : f32 from vector<1x1x1xf32>
    %cst_48 = arith.constant 0.000000e+00 : f32
    %135 = arith.addf %cst_48, %134 : f32
    %cst_49 = arith.constant 0.000000e+00 : f32
    %136 = arith.subf %cst_49, %135 : f32
    %cst_50 = arith.constant 4.000000e+00 : f32
    %137 = arith.divf %136, %cst_50 : f32
    %c0_51 = arith.constant 0 : index
    %c0_52 = arith.constant 0 : index
    %138 = memref.load %arg9[%c0_51, %c0_52] : memref<1x1xf32, #tpu.memory_space<smem>>
    memref.store %137, %arg9[%c0_51, %c0_52] : memref<1x1xf32, #tpu.memory_space<smem>>
    return
  }
}

</mosaic_0001>

<llo_original>
// kernel: simclr_forward.1
$region0: #{simclr_forward.1}
  #allocation0 [shape = 'u32[]', space=smem, size = 0x4, offset = 0x4, fixed_abs, tag = 'smem constant byte address 0x4 - core index']
  #allocation1 [shape = 'u32[144,128]{1,0:T(1,128)}', space=vmem, size = 0x12000, scoped, tag = 'internal scratch']
  %s0 = inlined_call_operand.vmem [shape: f32[36,1024], index: 0, kind: input, shape index: {}]
  %s1 = inlined_call_operand.vmem [shape: f32[32,36], index: 1, kind: input, shape index: {}]
  %s2 = inlined_call_operand.vmem [shape: f32[32,1], index: 2, kind: input, shape index: {}]
  %s3 = inlined_call_operand.vmem [shape: f32[32,64], index: 3, kind: input, shape index: {}]
  %s4 = inlined_call_operand.vmem [shape: f32[1,64], index: 4, kind: input, shape index: {}]
  %s5 = inlined_call_operand.vmem [shape: f32[1,64], index: 5, kind: input, shape index: {}]
  %s6 = inlined_call_operand.vmem [shape: f32[1,64], index: 6, kind: input, shape index: {}]
  %s7 = inlined_call_operand.vmem [shape: f32[64,16], index: 7, kind: input, shape index: {}]
  %s8 = inlined_call_operand.vmem [shape: f32[1,16], index: 8, kind: input, shape index: {}]
  %s9 = inlined_call_operand.hbm [shape: f32[1,1], index: 9, kind: output, shape index: {}]
  %s10 = sld [smem:[#allocation0]]
  $region46: #{simclr_forward.1} parent=0
    _
  %s12 = ssub.s32 1, %s10
  %s13 = scalar_select 0, %s12, %s10
  $region1: #{simclr_forward.1} parent=0
    #allocation2 [shape = 'u8[512]{0}', space=smem, size = 0x200, scoped, tag = 'output window, operand 0, single buffered']
    #allocation3 [shape = 's32[1]{0}', space=sflag, size = 0x4, scoped, tag = 'scoped memory for simclr_forward.1']
    %14 = vsyncpa [#allocation3], 0
    // Predicated region
    $region2: #{simclr_forward.1} parent=1 // pred_check
      _
    $region3: #{simclr_forward.1} parent=1 // pred_check_branch
      %16 = sbr.rel (0) target = $region5
    $region4: #{simclr_forward.1} parent=1 // pred_region
      _
    $region5: #{simclr_forward.1} parent=1 // pred_fallthru
      _
    // Predicated region
    $region6: #{simclr_forward.1} parent=1 // pred_check
      _
    $region7: #{simclr_forward.1} parent=1 // pred_check_branch
      %18 = sbr.rel (0) target = $region9
    $region8: #{simclr_forward.1} parent=1 // pred_region
      _
    $region9: #{simclr_forward.1} parent=1 // pred_fallthru
      _
    // Predicated region
    $region10: #{simclr_forward.1} parent=1 // pred_check
      _
    $region11: #{simclr_forward.1} parent=1 // pred_check_branch
      %20 = sbr.rel (0) target = $region13
    $region12: #{simclr_forward.1} parent=1 // pred_region
      _
    $region13: #{simclr_forward.1} parent=1 // pred_fallthru
      _
    // Predicated region
    $region14: #{simclr_forward.1} parent=1 // pred_check
      _
    $region15: #{simclr_forward.1} parent=1 // pred_check_branch
      %22 = sbr.rel (0) target = $region17
    $region16: #{simclr_forward.1} parent=1 // pred_region
      _
    $region17: #{simclr_forward.1} parent=1 // pred_fallthru
      _
    // Predicated region
    $region18: #{simclr_forward.1} parent=1 // pred_check
      _
    $region19: #{simclr_forward.1} parent=1 // pred_check_branch
      %24 = sbr.rel (0) target = $region21
    $region20: #{simclr_forward.1} parent=1 // pred_region
      _
    $region21: #{simclr_forward.1} parent=1 // pred_fallthru
      _
    // Predicated region
    $region22: #{simclr_forward.1} parent=1 // pred_check
      _
    $region23: #{simclr_forward.1} parent=1 // pred_check_branch
      %26 = sbr.rel (0) target = $region25
    $region24: #{simclr_forward.1} parent=1 // pred_region
      _
    $region25: #{simclr_forward.1} parent=1 // pred_fallthru
      _
    // Predicated region
    $region26: #{simclr_forward.1} parent=1 // pred_check
      _
    $region27: #{simclr_forward.1} parent=1 // pred_check_branch
      %28 = sbr.rel (0) target = $region29
    $region28: #{simclr_forward.1} parent=1 // pred_region
      _
    $region29: #{simclr_forward.1} parent=1 // pred_fallthru
      _
    // Predicated region
    $region30: #{simclr_forward.1} parent=1 // pred_check
      _
    $region31: #{simclr_forward.1} parent=1 // pred_check_branch
      %30 = sbr.rel (0) target = $region33
    $region32: #{simclr_forward.1} parent=1 // pred_region
      _
    $region33: #{simclr_forward.1} parent=1 // pred_fallthru
      _
    // Predicated region
    $region34: #{simclr_forward.1} parent=1 // pred_check
      _
    $region35: #{simclr_forward.1} parent=1 // pred_check_branch
      %32 = sbr.rel (0) target = $region37
    $region36: #{simclr_forward.1} parent=1 // pred_region
      _
    $region37: #{simclr_forward.1} parent=1 // pred_fallthru
      _
    %v33 = vld [vmem:[%s1] sm:$0xff]
    %v34 = vld [vmem:[%s1 + $0x8] sm:$0xff]
    %v35 = vld [vmem:[%s1 + $0x10] sm:$0xff]
    %v36 = vld [vmem:[%s1 + $0x18] sm:$0xff]
    %v37 = vld [vmem:[%s0] sm:$0xff]
    %v38 = vld [vmem:[%s0 + $0x8] sm:$0xff]
    %v39 = vld [vmem:[%s0 + $0x10] sm:$0xff]
    %v40 = vld [vmem:[%s0 + $0x18] sm:$0xff]
    %v41 = vld [vmem:[%s0 + $0x20] sm:$0xff]
    %v42 = vld [vmem:[%s0 + $0x28] sm:$0xff]
    %v43 = vld [vmem:[%s0 + $0x30] sm:$0xff]
    %v44 = vld [vmem:[%s0 + $0x38] sm:$0xff]
    %v45 = vld [vmem:[%s0 + $0x40] sm:$0xff]
    %v46 = vld [vmem:[%s0 + $0x48] sm:$0xff]
    %v47 = vld [vmem:[%s0 + $0x50] sm:$0xff]
    %v48 = vld [vmem:[%s0 + $0x58] sm:$0xff]
    %v49 = vld [vmem:[%s0 + $0x60] sm:$0xff]
    %v50 = vld [vmem:[%s0 + $0x68] sm:$0xff]
    %v51 = vld [vmem:[%s0 + $0x70] sm:$0xff]
    %v52 = vld [vmem:[%s0 + $0x78] sm:$0xff]
    %v53 = vld [vmem:[%s0 + $0x80] sm:$0xff]
    %v54 = vld [vmem:[%s0 + $0x88] sm:$0xff]
    %v55 = vld [vmem:[%s0 + $0x90] sm:$0xff]
    %v56 = vld [vmem:[%s0 + $0x98] sm:$0xff]
    %v57 = vld [vmem:[%s0 + $0xa0] sm:$0xff]
    %v58 = vld [vmem:[%s0 + $0xa8] sm:$0xff]
    %v59 = vld [vmem:[%s0 + $0xb0] sm:$0xff]
    %v60 = vld [vmem:[%s0 + $0xb8] sm:$0xff]
    %v61 = vld [vmem:[%s0 + $0xc0] sm:$0xff]
    %v62 = vld [vmem:[%s0 + $0xc8] sm:$0xff]
    %v63 = vld [vmem:[%s0 + $0xd0] sm:$0xff]
    %v64 = vld [vmem:[%s0 + $0xd8] sm:$0xff]
    %v65 = vld [vmem:[%s0 + $0xe0] sm:$0xff]
    %v66 = vld [vmem:[%s0 + $0xe8] sm:$0xff]
    %v67 = vld [vmem:[%s0 + $0xf0] sm:$0xff]
    %v68 = vld [vmem:[%s0 + $0xf8] sm:$0xff]
    %v69 = vld [vmem:[%s0 + $0x100] sm:$0xf]
    %v70 = vld [vmem:[%s0 + $0x108] sm:$0xf]
    %v71 = vld [vmem:[%s0 + $0x110] sm:$0xf]
    %v72 = vld [vmem:[%s0 + $0x118] sm:$0xf]
    %v73 = vld [vmem:[%s0 + $0x120] sm:$0xf]
    %v74 = vld [vmem:[%s0 + $0x128] sm:$0xf]
    %v75 = vld [vmem:[%s0 + $0x130] sm:$0xf]
    %v76 = vld [vmem:[%s0 + $0x138] sm:$0xf]
    %v77 = vld [vmem:[%s2] sm:$0xff]
    %v78 = vld [vmem:[%s2 + $0x8] sm:$0xff]
    %v79 = vld [vmem:[%s2 + $0x10] sm:$0xff]
    %v80 = vld [vmem:[%s2 + $0x18] sm:$0xff]
    %82 = vset.pattern.permute.xlu0 0
    %83 = vperm.xlu0 %82, %v77
    %v84 = vpop.permute.xlu0 %83
    %87 = vset.pattern.permute.xlu0 0
    %88 = vperm.xlu0 %87, %v78
    %v89 = vpop.permute.xlu0 %88
    %92 = vset.pattern.permute.xlu0 0
    %93 = vperm.xlu0 %92, %v79
    %v94 = vpop.permute.xlu0 %93
    %97 = vset.pattern.permute.xlu0 0
    %98 = vperm.xlu0 %97, %v80
    %v99 = vpop.permute.xlu0 %98
    %vm101 = vcmask 293888
    %v103 = vsel %vm101, %v33, 0
    %v106 = vsel %vm101, %v34, 0
    %v109 = vsel %vm101, %v35, 0
    %v112 = vsel %vm101, %v36, 0
    %vm114 = vcmask 1043456
    %v116 = vsel %vm114, %v69, 0
    %v119 = vsel %vm114, %v70, 0
    %v122 = vsel %vm114, %v71, 0
    %v125 = vsel %vm114, %v72, 0
    %v128 = vsel %vm114, %v73, 0
    %v131 = vsel %vm114, %v74, 0
    %v134 = vsel %vm114, %v75, 0
    %v137 = vsel %vm114, %v76, 0
    %139 = vmatprep.subr.mxu0 0.0
    %140 = vmatpush1.msra.mxu0 0.0
    %141 = vmatprep.subr.mxu0 0.0
    %142 = vmatpush1.msra.mxu0 0.0
    %143 = vmatprep.subr.mxu0 0.0
    %144 = vmatpush1.msra.mxu0 0.0
    %145 = vmatprep.subr.mxu0 0.0
    %146 = vmatpush1.msra.mxu0 0.0
    %147 = vmatprep.subr.mxu0 0.0
    %148 = vmatpush1.msra.mxu0 0.0
    %149 = vmatprep.subr.mxu0 0.0
    %150 = vmatpush1.msra.mxu0 0.0
    %151 = vmatprep.subr.mxu0 0.0
    %152 = vmatpush1.msra.mxu0 0.0
    %153 = vmatprep.subr.mxu0 0.0
    %154 = vmatpush1.msra.mxu0 0.0
    %155 = vmatprep.subr.mxu0 0.0
    %156 = vmatpush1.msra.mxu0 0.0
    %157 = vmatprep.subr.mxu0 0.0
    %158 = vmatpush1.msra.mxu0 0.0
    %159 = vmatprep.subr.mxu0 0.0
    %160 = vmatpush1.msra.mxu0 0.0
    %161 = vmatprep.subr.mxu0 %v119
    %162 = vmatpush1.msra.mxu0 %v116
    %163 = vmatprep.subr.mxu0 %v62
    %164 = vmatpush1.msra.mxu0 %v61
    %165 = vmatprep.subr.mxu0 %v54
    %166 = vmatpush1.msra.mxu0 %v53
    %167 = vmatprep.subr.mxu0 %v46
    %168 = vmatpush1.msra.mxu0 %v45
    %169 = vmatprep.subr.mxu0 %v38
    %170 = vmatpush1.msra.mxu0 %v37
    %171 = vmatprep.subr.mxu0 0.0
    %172 = vmatpush2.msra.mxu0 0.0
    %173 = vmatprep.subr.mxu0 0.0
    %174 = vmatpush2.msra.mxu0 0.0
    %175 = vmatprep.subr.mxu0 0.0
    %176 = vmatpush2.msra.mxu0 0.0
    %177 = vmatprep.subr.mxu0 0.0
    %178 = vmatpush2.msra.mxu0 0.0
    %179 = vmatprep.subr.mxu0 0.0
    %180 = vmatpush2.msra.mxu0 0.0
    %181 = vmatprep.subr.mxu0 0.0
    %182 = vmatpush2.msra.mxu0 0.0
    %183 = vmatprep.subr.mxu0 0.0
    %184 = vmatpush2.msra.mxu0 0.0
    %185 = vmatprep.subr.mxu0 0.0
    %186 = vmatpush2.msra.mxu0 0.0
    %187 = vmatprep.subr.mxu0 0.0
    %188 = vmatpush2.msra.mxu0 0.0
    %189 = vmatprep.subr.mxu0 0.0
    %190 = vmatpush2.msra.mxu0 0.0
    %191 = vmatprep.subr.mxu0 0.0
    %192 = vmatpush2.msra.mxu0 0.0
    %193 = vmatprep.subr.mxu0 0.0
    %194 = vmatpush2.msra.mxu0 0.0
    %195 = vmatprep.subr.mxu0 0.0
    %196 = vmatpush2.msra.mxu0 0.0
    %197 = vmatprep.subr.mxu0 0.0
    %198 = vmatpush2.msra.mxu0 0.0
    %199 = vmatprep.subr.mxu0 0.0
    %200 = vmatpush2.msra.mxu0 0.0
    %201 = vmatprep.subr.mxu0 0.0
    %202 = vmatpush2.msra.mxu0 0.0
    %203 = vmatprep.mubr.f32.mxu0 0.0
    %204 = vmatmul.mubr.f32.gmra.mxu0 %v103
    %v205 = vpop.f32.mrf.mxu0
    %v206 = vadd.f32 %v84, %v205
    %v207 = vpop.f32.mrf.mxu0
    %v208 = vadd.f32 %v84, %v207
    %209 = vmatprep.mubr.f32.mxu0 0.0
    %210 = vmatmul.mubr.f32.gmra.mxu0 %v106
    %v211 = vpop.f32.mrf.mxu0
    %v212 = vadd.f32 %v89, %v211
    %v213 = vpop.f32.mrf.mxu0
    %v214 = vadd.f32 %v89, %v213
    %215 = vmatprep.mubr.f32.mxu0 0.0
    %216 = vmatmul.mubr.f32.gmra.mxu0 %v109
    %v217 = vpop.f32.mrf.mxu0
    %v218 = vadd.f32 %v94, %v217
    %v219 = vpop.f32.mrf.mxu0
    %v220 = vadd.f32 %v94, %v219
    %221 = vmatprep.mubr.f32.mxu0 0.0
    %222 = vmatmul.mubr.f32.gmra.mxu0 %v112
    %v223 = vpop.f32.mrf.mxu0
    %v224 = vadd.f32 %v99, %v223
    %v225 = vpop.f32.mrf.mxu0
    %v226 = vadd.f32 %v99, %v225
    %227 = vdwg.mxu0
    %228 = vmatprep.subr.mxu0 0.0
    %229 = vmatpush1.msra.mxu0 0.0
    %230 = vmatprep.subr.mxu0 0.0
    %231 = vmatpush1.msra.mxu0 0.0
    %232 = vmatprep.subr.mxu0 0.0
    %233 = vmatpush1.msra.mxu0 0.0
    %234 = vmatprep.subr.mxu0 0.0
    %235 = vmatpush1.msra.mxu0 0.0
    %236 = vmatprep.subr.mxu0 0.0
    %237 = vmatpush1.msra.mxu0 0.0
    %238 = vmatprep.subr.mxu0 0.0
    %239 = vmatpush1.msra.mxu0 0.0
    %240 = vmatprep.subr.mxu0 0.0
    %241 = vmatpush1.msra.mxu0 0.0
    %242 = vmatprep.subr.mxu0 0.0
    %243 = vmatpush1.msra.mxu0 0.0
    %244 = vmatprep.subr.mxu0 0.0
    %245 = vmatpush1.msra.mxu0 0.0
    %246 = vmatprep.subr.mxu0 0.0
    %247 = vmatpush1.msra.mxu0 0.0
    %248 = vmatprep.subr.mxu0 0.0
    %249 = vmatpush1.msra.mxu0 0.0
    %250 = vmatprep.subr.mxu0 %v125
    %251 = vmatpush1.msra.mxu0 %v122
    %252 = vmatprep.subr.mxu0 %v64
    %253 = vmatpush1.msra.mxu0 %v63
    %254 = vmatprep.subr.mxu0 %v56
    %255 = vmatpush1.msra.mxu0 %v55
    %256 = vmatprep.subr.mxu0 %v48
    %257 = vmatpush1.msra.mxu0 %v47
    %258 = vmatprep.subr.mxu0 %v40
    %259 = vmatpush1.msra.mxu0 %v39
    %260 = vmatprep.subr.mxu0 0.0
    %261 = vmatpush2.msra.mxu0 0.0
    %262 = vmatprep.subr.mxu0 0.0
    %263 = vmatpush2.msra.mxu0 0.0
    %264 = vmatprep.subr.mxu0 0.0
    %265 = vmatpush2.msra.mxu0 0.0
    %266 = vmatprep.subr.mxu0 0.0
    %267 = vmatpush2.msra.mxu0 0.0
    %268 = vmatprep.subr.mxu0 0.0
    %269 = vmatpush2.msra.mxu0 0.0
    %270 = vmatprep.subr.mxu0 0.0
    %271 = vmatpush2.msra.mxu0 0.0
    %272 = vmatprep.subr.mxu0 0.0
    %273 = vmatpush2.msra.mxu0 0.0
    %274 = vmatprep.subr.mxu0 0.0
    %275 = vmatpush2.msra.mxu0 0.0
    %276 = vmatprep.subr.mxu0 0.0
    %277 = vmatpush2.msra.mxu0 0.0
    %278 = vmatprep.subr.mxu0 0.0
    %279 = vmatpush2.msra.mxu0 0.0
    %280 = vmatprep.subr.mxu0 0.0
    %281 = vmatpush2.msra.mxu0 0.0
    %282 = vmatprep.subr.mxu0 0.0
    %283 = vmatpush2.msra.mxu0 0.0
    %284 = vmatprep.subr.mxu0 0.0
    %285 = vmatpush2.msra.mxu0 0.0
    %286 = vmatprep.subr.mxu0 0.0
    %287 = vmatpush2.msra.mxu0 0.0
    %288 = vmatprep.subr.mxu0 0.0
    %289 = vmatpush2.msra.mxu0 0.0
    %290 = vmatprep.subr.mxu0 0.0
    %291 = vmatpush2.msra.mxu0 0.0
    %292 = vmatprep.mubr.f32.mxu0 0.0
    %293 = vmatmul.mubr.f32.gmra.mxu0 %v103
    %v294 = vpop.f32.mrf.mxu0
    %v295 = vadd.f32 %v84, %v294
    %v296 = vpop.f32.mrf.mxu0
    %v297 = vadd.f32 %v84, %v296
    %298 = vmatprep.mubr.f32.mxu0 0.0
    %299 = vmatmul.mubr.f32.gmra.mxu0 %v106
    %v300 = vpop.f32.mrf.mxu0
    %v301 = vadd.f32 %v89, %v300
    %v302 = vpop.f32.mrf.mxu0
    %v303 = vadd.f32 %v89, %v302
    %304 = vmatprep.mubr.f32.mxu0 0.0
    %305 = vmatmul.mubr.f32.gmra.mxu0 %v109
    %v306 = vpop.f32.mrf.mxu0
    %v307 = vadd.f32 %v94, %v306
    %v308 = vpop.f32.mrf.mxu0
    %v309 = vadd.f32 %v94, %v308
    %310 = vmatprep.mubr.f32.mxu0 0.0
    %311 = vmatmul.mubr.f32.gmra.mxu0 %v112
    %v312 = vpop.f32.mrf.mxu0
    %v313 = vadd.f32 %v99, %v312
    %v314 = vpop.f32.mrf.mxu0
    %v315 = vadd.f32 %v99, %v314
    %316 = vdwg.mxu0
    %317 = vmatprep.subr.mxu0 0.0
    %318 = vmatpush1.msra.mxu0 0.0
    %319 = vmatprep.subr.mxu0 0.0
    %320 = vmatpush1.msra.mxu0 0.0
    %321 = vmatprep.subr.mxu0 0.0
    %322 = vmatpush1.msra.mxu0 0.0
    %323 = vmatprep.subr.mxu0 0.0
    %324 = vmatpush1.msra.mxu0 0.0
    %325 = vmatprep.subr.mxu0 0.0
    %326 = vmatpush1.msra.mxu0 0.0
    %327 = vmatprep.subr.mxu0 0.0
    %328 = vmatpush1.msra.mxu0 0.0
    %329 = vmatprep.subr.mxu0 0.0
    %330 = vmatpush1.msra.mxu0 0.0
    %331 = vmatprep.subr.mxu0 0.0
    %332 = vmatpush1.msra.mxu0 0.0
    %333 = vmatprep.subr.mxu0 0.0
    %334 = vmatpush1.msra.mxu0 0.0
    %335 = vmatprep.subr.mxu0 0.0
    %336 = vmatpush1.msra.mxu0 0.0
    %337 = vmatprep.subr.mxu0 0.0
    %338 = vmatpush1.msra.mxu0 0.0
    %339 = vmatprep.subr.mxu0 %v131
    %340 = vmatpush1.msra.mxu0 %v128
    %341 = vmatprep.subr.mxu0 %v66
    %342 = vmatpush1.msra.mxu0 %v65
    %343 = vmatprep.subr.mxu0 %v58
    %344 = vmatpush1.msra.mxu0 %v57
    %345 = vmatprep.subr.mxu0 %v50
    %346 = vmatpush1.msra.mxu0 %v49
    %347 = vmatprep.subr.mxu0 %v42
    %348 = vmatpush1.msra.mxu0 %v41
    %349 = vmatprep.subr.mxu0 0.0
    %350 = vmatpush2.msra.mxu0 0.0
    %351 = vmatprep.subr.mxu0 0.0
    %352 = vmatpush2.msra.mxu0 0.0
    %353 = vmatprep.subr.mxu0 0.0
    %354 = vmatpush2.msra.mxu0 0.0
    %355 = vmatprep.subr.mxu0 0.0
    %356 = vmatpush2.msra.mxu0 0.0
    %357 = vmatprep.subr.mxu0 0.0
    %358 = vmatpush2.msra.mxu0 0.0
    %359 = vmatprep.subr.mxu0 0.0
    %360 = vmatpush2.msra.mxu0 0.0
    %361 = vmatprep.subr.mxu0 0.0
    %362 = vmatpush2.msra.mxu0 0.0
    %363 = vmatprep.subr.mxu0 0.0
    %364 = vmatpush2.msra.mxu0 0.0
    %365 = vmatprep.subr.mxu0 0.0
    %366 = vmatpush2.msra.mxu0 0.0
    %367 = vmatprep.subr.mxu0 0.0
    %368 = vmatpush2.msra.mxu0 0.0
    %369 = vmatprep.subr.mxu0 0.0
    %370 = vmatpush2.msra.mxu0 0.0
    %371 = vmatprep.subr.mxu0 0.0
    %372 = vmatpush2.msra.mxu0 0.0
    %373 = vmatprep.subr.mxu0 0.0
    %374 = vmatpush2.msra.mxu0 0.0
    %375 = vmatprep.subr.mxu0 0.0
    %376 = vmatpush2.msra.mxu0 0.0
    %377 = vmatprep.subr.mxu0 0.0
    %378 = vmatpush2.msra.mxu0 0.0
    %379 = vmatprep.subr.mxu0 0.0
    %380 = vmatpush2.msra.mxu0 0.0
    %381 = vmatprep.mubr.f32.mxu0 0.0
    %382 = vmatmul.mubr.f32.gmra.mxu0 %v103
    %v383 = vpop.f32.mrf.mxu0
    %v384 = vadd.f32 %v84, %v383
    %v385 = vpop.f32.mrf.mxu0
    %v386 = vadd.f32 %v84, %v385
    %387 = vmatprep.mubr.f32.mxu0 0.0
    %388 = vmatmul.mubr.f32.gmra.mxu0 %v106
    %v389 = vpop.f32.mrf.mxu0
    %v390 = vadd.f32 %v89, %v389
    %v391 = vpop.f32.mrf.mxu0
    %v392 = vadd.f32 %v89, %v391
    %393 = vmatprep.mubr.f32.mxu0 0.0
    %394 = vmatmul.mubr.f32.gmra.mxu0 %v109
    %v395 = vpop.f32.mrf.mxu0
    %v396 = vadd.f32 %v94, %v395
    %v397 = vpop.f32.mrf.mxu0
    %v398 = vadd.f32 %v94, %v397
    %399 = vmatprep.mubr.f32.mxu0 0.0
    %400 = vmatmul.mubr.f32.gmra.mxu0 %v112
    %v401 = vpop.f32.mrf.mxu0
    %v402 = vadd.f32 %v99, %v401
    %v403 = vpop.f32.mrf.mxu0
    %v404 = vadd.f32 %v99, %v403
    %405 = vdwg.mxu0
    %406 = vmatprep.subr.mxu0 0.0
    %407 = vmatpush1.msra.mxu0 0.0
    %408 = vmatprep.subr.mxu0 0.0
    %409 = vmatpush1.msra.mxu0 0.0
    %410 = vmatprep.subr.mxu0 0.0
    %411 = vmatpush1.msra.mxu0 0.0
    %412 = vmatprep.subr.mxu0 0.0
    %413 = vmatpush1.msra.mxu0 0.0
    %414 = vmatprep.subr.mxu0 0.0
    %415 = vmatpush1.msra.mxu0 0.0
    %416 = vmatprep.subr.mxu0 0.0
    %417 = vmatpush1.msra.mxu0 0.0
    %418 = vmatprep.subr.mxu0 0.0
    %419 = vmatpush1.msra.mxu0 0.0
    %420 = vmatprep.subr.mxu0 0.0
    %421 = vmatpush1.msra.mxu0 0.0
    %422 = vmatprep.subr.mxu0 0.0
    %423 = vmatpush1.msra.mxu0 0.0
    %424 = vmatprep.subr.mxu0 0.0
    %425 = vmatpush1.msra.mxu0 0.0
    %426 = vmatprep.subr.mxu0 0.0
    %427 = vmatpush1.msra.mxu0 0.0
    %428 = vmatprep.subr.mxu0 %v137
    %429 = vmatpush1.msra.mxu0 %v134
    %430 = vmatprep.subr.mxu0 %v68
    %431 = vmatpush1.msra.mxu0 %v67
    %432 = vmatprep.subr.mxu0 %v60
    %433 = vmatpush1.msra.mxu0 %v59
    %434 = vmatprep.subr.mxu0 %v52
    %435 = vmatpush1.msra.mxu0 %v51
    %436 = vmatprep.subr.mxu0 %v44
    %437 = vmatpush1.msra.mxu0 %v43
    %438 = vmatprep.subr.mxu0 0.0
    %439 = vmatpush2.msra.mxu0 0.0
    %440 = vmatprep.subr.mxu0 0.0
    %441 = vmatpush2.msra.mxu0 0.0
    %442 = vmatprep.subr.mxu0 0.0
    %443 = vmatpush2.msra.mxu0 0.0
    %444 = vmatprep.subr.mxu0 0.0
    %445 = vmatpush2.msra.mxu0 0.0
    %446 = vmatprep.subr.mxu0 0.0
    %447 = vmatpush2.msra.mxu0 0.0
    %448 = vmatprep.subr.mxu0 0.0
    %449 = vmatpush2.msra.mxu0 0.0
    %450 = vmatprep.subr.mxu0 0.0
    %451 = vmatpush2.msra.mxu0 0.0
    %452 = vmatprep.subr.mxu0 0.0
    %453 = vmatpush2.msra.mxu0 0.0
    %454 = vmatprep.subr.mxu0 0.0
    %455 = vmatpush2.msra.mxu0 0.0
    %456 = vmatprep.subr.mxu0 0.0
    %457 = vmatpush2.msra.mxu0 0.0
    %458 = vmatprep.subr.mxu0 0.0
    %459 = vmatpush2.msra.mxu0 0.0
    %460 = vmatprep.subr.mxu0 0.0
    %461 = vmatpush2.msra.mxu0 0.0
    %462 = vmatprep.subr.mxu0 0.0
    %463 = vmatpush2.msra.mxu0 0.0
    %464 = vmatprep.subr.mxu0 0.0
    %465 = vmatpush2.msra.mxu0 0.0
    %466 = vmatprep.subr.mxu0 0.0
    %467 = vmatpush2.msra.mxu0 0.0
    %468 = vmatprep.subr.mxu0 0.0
    %469 = vmatpush2.msra.mxu0 0.0
    %470 = vmatprep.mubr.f32.mxu0 0.0
    %471 = vmatmul.mubr.f32.gmra.mxu0 %v103
    %v472 = vpop.f32.mrf.mxu0
    %v473 = vadd.f32 %v84, %v472
    %v474 = vpop.f32.mrf.mxu0
    %v475 = vadd.f32 %v84, %v474
    %476 = vmatprep.mubr.f32.mxu0 0.0
    %477 = vmatmul.mubr.f32.gmra.mxu0 %v106
    %v478 = vpop.f32.mrf.mxu0
    %v479 = vadd.f32 %v89, %v478
    %v480 = vpop.f32.mrf.mxu0
    %v481 = vadd.f32 %v89, %v480
    %482 = vmatprep.mubr.f32.mxu0 0.0
    %483 = vmatmul.mubr.f32.gmra.mxu0 %v109
    %v484 = vpop.f32.mrf.mxu0
    %v485 = vadd.f32 %v94, %v484
    %v486 = vpop.f32.mrf.mxu0
    %v487 = vadd.f32 %v94, %v486
    %488 = vmatprep.mubr.f32.mxu0 0.0
    %489 = vmatmul.mubr.f32.gmra.mxu0 %v112
    %v490 = vpop.f32.mrf.mxu0
    %v491 = vadd.f32 %v99, %v490
    %v492 = vpop.f32.mrf.mxu0
    %v493 = vadd.f32 %v99, %v492
    %494 = vdwg.mxu0
    %v495 = vmax.f32 %v206, 0.0
    %v496 = vmax.f32 %v208, 0.0
    %v497 = vmax.f32 %v295, 0.0
    %v498 = vmax.f32 %v297, 0.0
    %v499 = vmax.f32 %v384, 0.0
    %v500 = vmax.f32 %v386, 0.0
    %v501 = vmax.f32 %v473, 0.0
    %v502 = vmax.f32 %v475, 0.0
    %v503 = vmax.f32 %v212, 0.0
    %v504 = vmax.f32 %v214, 0.0
    %v505 = vmax.f32 %v301, 0.0
    %v506 = vmax.f32 %v303, 0.0
    %v507 = vmax.f32 %v390, 0.0
    %v508 = vmax.f32 %v392, 0.0
    %v509 = vmax.f32 %v479, 0.0
    %v510 = vmax.f32 %v481, 0.0
    %v511 = vmax.f32 %v218, 0.0
    %v512 = vmax.f32 %v220, 0.0
    %v513 = vmax.f32 %v307, 0.0
    %v514 = vmax.f32 %v309, 0.0
    %v515 = vmax.f32 %v396, 0.0
    %v516 = vmax.f32 %v398, 0.0
    %v517 = vmax.f32 %v485, 0.0
    %v518 = vmax.f32 %v487, 0.0
    %v519 = vmax.f32 %v224, 0.0
    %v520 = vmax.f32 %v226, 0.0
    %v521 = vmax.f32 %v313, 0.0
    %v522 = vmax.f32 %v315, 0.0
    %v523 = vmax.f32 %v402, 0.0
    %v524 = vmax.f32 %v404, 0.0
    %v525 = vmax.f32 %v491, 0.0
    %v526 = vmax.f32 %v493, 0.0
    %v527 = vlaneseq
    %v528 = vshrl.u32 %v527, 7
    %v529 = vlaneseq
    %v530 = vand.u32 %v529, 127
    %v531 = vadd.s32 %v530, 128
    %v532 = vadd.s32 %v530, 256
    %v533 = vadd.s32 %v530, 384
    %v534 = vadd.s32 %v530, 512
    %v535 = vadd.s32 %v530, 640
    %v536 = vadd.s32 %v530, 768
    %v537 = vadd.s32 %v530, 896
    %v538 = vmul.u32 %v528, 256
    %vm539 = vcmp.ge.s32.totalorder %v530, %v538
    %vm540 = vcmp.ge.s32.totalorder %v531, %v538
    %vm541 = vcmp.ge.s32.totalorder %v532, %v538
    %vm542 = vcmp.ge.s32.totalorder %v533, %v538
    %vm543 = vcmp.ge.s32.totalorder %v534, %v538
    %vm544 = vcmp.ge.s32.totalorder %v535, %v538
    %vm545 = vcmp.ge.s32.totalorder %v536, %v538
    %vm546 = vcmp.ge.s32.totalorder %v537, %v538
    %v547 = vadd.s32 %v528, 1
    %v548 = vmul.u32 %v547, 256
    %vm549 = vcmp.lt.s32.totalorder %v530, %v548
    %vm550 = vcmp.lt.s32.totalorder %v531, %v548
    %vm551 = vcmp.lt.s32.totalorder %v532, %v548
    %vm552 = vcmp.lt.s32.totalorder %v533, %v548
    %vm553 = vcmp.lt.s32.totalorder %v534, %v548
    %vm554 = vcmp.lt.s32.totalorder %v535, %v548
    %vm555 = vcmp.lt.s32.totalorder %v536, %v548
    %vm556 = vcmp.lt.s32.totalorder %v537, %v548
    %vm557 = vmand %vm539, %vm549
    %vm558 = vmand %vm540, %vm550
    %vm559 = vmand %vm541, %vm551
    %vm560 = vmand %vm542, %vm552
    %vm561 = vmand %vm543, %vm553
    %vm562 = vmand %vm544, %vm554
    %vm563 = vmand %vm545, %vm555
    %vm564 = vmand %vm546, %vm556
    %v565 = vsel %vm557, 0.00390625, 0.0
    %v566 = vsel %vm558, 0.00390625, 0.0
    %v567 = vsel %vm559, 0.00390625, 0.0
    %v568 = vsel %vm560, 0.00390625, 0.0
    %v569 = vsel %vm561, 0.00390625, 0.0
    %v570 = vsel %vm562, 0.00390625, 0.0
    %v571 = vsel %vm563, 0.00390625, 0.0
    %v572 = vsel %vm564, 0.00390625, 0.0
    %573 = vmatprep.subr.mxu0 0.0
    %574 = vmatpush1.xpose.msra.mxu0 0.0
    %575 = vmatprep.subr.mxu0 0.0
    %576 = vmatpush1.xpose.msra.mxu0 0.0
    %577 = vmatprep.subr.mxu0 0.0
    %578 = vmatpush1.xpose.msra.mxu0 0.0
    %579 = vmatprep.subr.mxu0 0.0
    %580 = vmatpush1.xpose.msra.mxu0 0.0
    %581 = vmatprep.subr.mxu0 0.0
    %582 = vmatpush1.xpose.msra.mxu0 0.0
    %583 = vmatprep.subr.mxu0 0.0
    %584 = vmatpush1.xpose.msra.mxu0 0.0
    %585 = vmatprep.subr.mxu0 0.0
    %586 = vmatpush1.xpose.msra.mxu0 0.0
    %587 = vmatprep.subr.mxu0 0.0
    %588 = vmatpush1.xpose.msra.mxu0 0.0
    %589 = vmatprep.subr.mxu0 0.0
    %590 = vmatpush1.xpose.msra.mxu0 0.0
    %591 = vmatprep.subr.mxu0 0.0
    %592 = vmatpush1.xpose.msra.mxu0 0.0
    %593 = vmatprep.subr.mxu0 0.0
    %594 = vmatpush1.xpose.msra.mxu0 0.0
    %595 = vmatprep.subr.mxu0 0.0
    %596 = vmatpush1.xpose.msra.mxu0 0.0
    %597 = vmatprep.subr.mxu0 %v520
    %598 = vmatpush1.xpose.msra.mxu0 %v519
    %599 = vmatprep.subr.mxu0 %v512
    %600 = vmatpush1.xpose.msra.mxu0 %v511
    %601 = vmatprep.subr.mxu0 %v504
    %602 = vmatpush1.xpose.msra.mxu0 %v503
    %603 = vmatprep.subr.mxu0 %v496
    %604 = vmatpush1.xpose.msra.mxu0 %v495
    %605 = vmatprep.subr.mxu0 0.0
    %606 = vmatpush2.xpose.msra.mxu0 0.0
    %607 = vmatprep.subr.mxu0 0.0
    %608 = vmatpush2.xpose.msra.mxu0 0.0
    %609 = vmatprep.subr.mxu0 0.0
    %610 = vmatpush2.xpose.msra.mxu0 0.0
    %611 = vmatprep.subr.mxu0 0.0
    %612 = vmatpush2.xpose.msra.mxu0 0.0
    %613 = vmatprep.subr.mxu0 0.0
    %614 = vmatpush2.xpose.msra.mxu0 0.0
    %615 = vmatprep.subr.mxu0 0.0
    %616 = vmatpush2.xpose.msra.mxu0 0.0
    %617 = vmatprep.subr.mxu0 0.0
    %618 = vmatpush2.xpose.msra.mxu0 0.0
    %619 = vmatprep.subr.mxu0 0.0
    %620 = vmatpush2.xpose.msra.mxu0 0.0
    %621 = vmatprep.subr.mxu0 0.0
    %622 = vmatpush2.xpose.msra.mxu0 0.0
    %623 = vmatprep.subr.mxu0 0.0
    %624 = vmatpush2.xpose.msra.mxu0 0.0
    %625 = vmatprep.subr.mxu0 0.0
    %626 = vmatpush2.xpose.msra.mxu0 0.0
    %627 = vmatprep.subr.mxu0 0.0
    %628 = vmatpush2.xpose.msra.mxu0 0.0
    %629 = vmatprep.subr.mxu0 0.0
    %630 = vmatpush2.xpose.msra.mxu0 0.0
    %631 = vmatprep.subr.mxu0 0.0
    %632 = vmatpush2.xpose.msra.mxu0 0.0
    %633 = vmatprep.subr.mxu0 0.0
    %634 = vmatpush2.xpose.msra.mxu0 0.0
    %635 = vmatprep.subr.mxu0 0.0
    %636 = vmatpush2.xpose.msra.mxu0 0.0
    %637 = vmatprep.mubr.f32.mxu0 %v566
    %638 = vmatmul.mubr.f32.gmra.mxu0 %v565
    %v639 = vpop.f32.mrf.mxu0
    %v640 = vadd.f32 0.0, %v639
    %v641 = vpop.f32.mrf.mxu0
    %642 = vdwg.mxu0
    %643 = vmatprep.subr.mxu0 0.0
    %644 = vmatpush1.xpose.msra.mxu0 0.0
    %645 = vmatprep.subr.mxu0 0.0
    %646 = vmatpush1.xpose.msra.mxu0 0.0
    %647 = vmatprep.subr.mxu0 0.0
    %648 = vmatpush1.xpose.msra.mxu0 0.0
    %649 = vmatprep.subr.mxu0 0.0
    %650 = vmatpush1.xpose.msra.mxu0 0.0
    %651 = vmatprep.subr.mxu0 0.0
    %652 = vmatpush1.xpose.msra.mxu0 0.0
    %653 = vmatprep.subr.mxu0 0.0
    %654 = vmatpush1.xpose.msra.mxu0 0.0
    %655 = vmatprep.subr.mxu0 0.0
    %656 = vmatpush1.xpose.msra.mxu0 0.0
    %657 = vmatprep.subr.mxu0 0.0
    %658 = vmatpush1.xpose.msra.mxu0 0.0
    %659 = vmatprep.subr.mxu0 0.0
    %660 = vmatpush1.xpose.msra.mxu0 0.0
    %661 = vmatprep.subr.mxu0 0.0
    %662 = vmatpush1.xpose.msra.mxu0 0.0
    %663 = vmatprep.subr.mxu0 0.0
    %664 = vmatpush1.xpose.msra.mxu0 0.0
    %665 = vmatprep.subr.mxu0 0.0
    %666 = vmatpush1.xpose.msra.mxu0 0.0
    %667 = vmatprep.subr.mxu0 %v522
    %668 = vmatpush1.xpose.msra.mxu0 %v521
    %669 = vmatprep.subr.mxu0 %v514
    %670 = vmatpush1.xpose.msra.mxu0 %v513
    %671 = vmatprep.subr.mxu0 %v506
    %672 = vmatpush1.xpose.msra.mxu0 %v505
    %673 = vmatprep.subr.mxu0 %v498
    %674 = vmatpush1.xpose.msra.mxu0 %v497
    %675 = vmatprep.subr.mxu0 0.0
    %676 = vmatpush2.xpose.msra.mxu0 0.0
    %677 = vmatprep.subr.mxu0 0.0
    %678 = vmatpush2.xpose.msra.mxu0 0.0
    %679 = vmatprep.subr.mxu0 0.0
    %680 = vmatpush2.xpose.msra.mxu0 0.0
    %681 = vmatprep.subr.mxu0 0.0
    %682 = vmatpush2.xpose.msra.mxu0 0.0
    %683 = vmatprep.subr.mxu0 0.0
    %684 = vmatpush2.xpose.msra.mxu0 0.0
    %685 = vmatprep.subr.mxu0 0.0
    %686 = vmatpush2.xpose.msra.mxu0 0.0
    %687 = vmatprep.subr.mxu0 0.0
    %688 = vmatpush2.xpose.msra.mxu0 0.0
    %689 = vmatprep.subr.mxu0 0.0
    %690 = vmatpush2.xpose.msra.mxu0 0.0
    %691 = vmatprep.subr.mxu0 0.0
    %692 = vmatpush2.xpose.msra.mxu0 0.0
    %693 = vmatprep.subr.mxu0 0.0
    %694 = vmatpush2.xpose.msra.mxu0 0.0
    %695 = vmatprep.subr.mxu0 0.0
    %696 = vmatpush2.xpose.msra.mxu0 0.0
    %697 = vmatprep.subr.mxu0 0.0
    %698 = vmatpush2.xpose.msra.mxu0 0.0
    %699 = vmatprep.subr.mxu0 0.0
    %700 = vmatpush2.xpose.msra.mxu0 0.0
    %701 = vmatprep.subr.mxu0 0.0
    %702 = vmatpush2.xpose.msra.mxu0 0.0
    %703 = vmatprep.subr.mxu0 0.0
    %704 = vmatpush2.xpose.msra.mxu0 0.0
    %705 = vmatprep.subr.mxu0 0.0
    %706 = vmatpush2.xpose.msra.mxu0 0.0
    %707 = vmatprep.mubr.f32.mxu0 %v568
    %708 = vmatmul.mubr.f32.gmra.mxu0 %v567
    %v709 = vpop.f32.mrf.mxu0
    %v710 = vadd.f32 %v640, %v709
    %v711 = vpop.f32.mrf.mxu0
    %712 = vdwg.mxu0
    %713 = vmatprep.subr.mxu0 0.0
    %714 = vmatpush1.xpose.msra.mxu0 0.0
    %715 = vmatprep.subr.mxu0 0.0
    %716 = vmatpush1.xpose.msra.mxu0 0.0
    %717 = vmatprep.subr.mxu0 0.0
    %718 = vmatpush1.xpose.msra.mxu0 0.0
    %719 = vmatprep.subr.mxu0 0.0
    %720 = vmatpush1.xpose.msra.mxu0 0.0
    %721 = vmatprep.subr.mxu0 0.0
    %722 = vmatpush1.xpose.msra.mxu0 0.0
    %723 = vmatprep.subr.mxu0 0.0
    %724 = vmatpush1.xpose.msra.mxu0 0.0
    %725 = vmatprep.subr.mxu0 0.0
    %726 = vmatpush1.xpose.msra.mxu0 0.0
    %727 = vmatprep.subr.mxu0 0.0
    %728 = vmatpush1.xpose.msra.mxu0 0.0
    %729 = vmatprep.subr.mxu0 0.0
    %730 = vmatpush1.xpose.msra.mxu0 0.0
    %731 = vmatprep.subr.mxu0 0.0
    %732 = vmatpush1.xpose.msra.mxu0 0.0
    %733 = vmatprep.subr.mxu0 0.0
    %734 = vmatpush1.xpose.msra.mxu0 0.0
    %735 = vmatprep.subr.mxu0 0.0
    %736 = vmatpush1.xpose.msra.mxu0 0.0
    %737 = vmatprep.subr.mxu0 %v524
    %738 = vmatpush1.xpose.msra.mxu0 %v523
    %739 = vmatprep.subr.mxu0 %v516
    %740 = vmatpush1.xpose.msra.mxu0 %v515
    %741 = vmatprep.subr.mxu0 %v508
    %742 = vmatpush1.xpose.msra.mxu0 %v507
    %743 = vmatprep.subr.mxu0 %v500
    %744 = vmatpush1.xpose.msra.mxu0 %v499
    %745 = vmatprep.subr.mxu0 0.0
    %746 = vmatpush2.xpose.msra.mxu0 0.0
    %747 = vmatprep.subr.mxu0 0.0
    %748 = vmatpush2.xpose.msra.mxu0 0.0
    %749 = vmatprep.subr.mxu0 0.0
    %750 = vmatpush2.xpose.msra.mxu0 0.0
    %751 = vmatprep.subr.mxu0 0.0
    %752 = vmatpush2.xpose.msra.mxu0 0.0
    %753 = vmatprep.subr.mxu0 0.0
    %754 = vmatpush2.xpose.msra.mxu0 0.0
    %755 = vmatprep.subr.mxu0 0.0
    %756 = vmatpush2.xpose.msra.mxu0 0.0
    %757 = vmatprep.subr.mxu0 0.0
    %758 = vmatpush2.xpose.msra.mxu0 0.0
    %759 = vmatprep.subr.mxu0 0.0
    %760 = vmatpush2.xpose.msra.mxu0 0.0
    %761 = vmatprep.subr.mxu0 0.0
    %762 = vmatpush2.xpose.msra.mxu0 0.0
    %763 = vmatprep.subr.mxu0 0.0
    %764 = vmatpush2.xpose.msra.mxu0 0.0
    %765 = vmatprep.subr.mxu0 0.0
    %766 = vmatpush2.xpose.msra.mxu0 0.0
    %767 = vmatprep.subr.mxu0 0.0
    %768 = vmatpush2.xpose.msra.mxu0 0.0
    %769 = vmatprep.subr.mxu0 0.0
    %770 = vmatpush2.xpose.msra.mxu0 0.0
    %771 = vmatprep.subr.mxu0 0.0
    %772 = vmatpush2.xpose.msra.mxu0 0.0
    %773 = vmatprep.subr.mxu0 0.0
    %774 = vmatpush2.xpose.msra.mxu0 0.0
    %775 = vmatprep.subr.mxu0 0.0
    %776 = vmatpush2.xpose.msra.mxu0 0.0
    %777 = vmatprep.mubr.f32.mxu0 %v570
    %778 = vmatmul.mubr.f32.gmra.mxu0 %v569
    %v779 = vpop.f32.mrf.mxu0
    %v780 = vadd.f32 %v710, %v779
    %v781 = vpop.f32.mrf.mxu0
    %782 = vdwg.mxu0
    %783 = vmatprep.subr.mxu0 0.0
    %784 = vmatpush1.xpose.msra.mxu0 0.0
    %785 = vmatprep.subr.mxu0 0.0
    %786 = vmatpush1.xpose.msra.mxu0 0.0
    %787 = vmatprep.subr.mxu0 0.0
    %788 = vmatpush1.xpose.msra.mxu0 0.0
    %789 = vmatprep.subr.mxu0 0.0
    %790 = vmatpush1.xpose.msra.mxu0 0.0
    %791 = vmatprep.subr.mxu0 0.0
    %792 = vmatpush1.xpose.msra.mxu0 0.0
    %793 = vmatprep.subr.mxu0 0.0
    %794 = vmatpush1.xpose.msra.mxu0 0.0
    %795 = vmatprep.subr.mxu0 0.0
    %796 = vmatpush1.xpose.msra.mxu0 0.0
    %797 = vmatprep.subr.mxu0 0.0
    %798 = vmatpush1.xpose.msra.mxu0 0.0
    %799 = vmatprep.subr.mxu0 0.0
    %800 = vmatpush1.xpose.msra.mxu0 0.0
    %801 = vmatprep.subr.mxu0 0.0
    %802 = vmatpush1.xpose.msra.mxu0 0.0
    %803 = vmatprep.subr.mxu0 0.0
    %804 = vmatpush1.xpose.msra.mxu0 0.0
    %805 = vmatprep.subr.mxu0 0.0
    %806 = vmatpush1.xpose.msra.mxu0 0.0
    %807 = vmatprep.subr.mxu0 %v526
    %808 = vmatpush1.xpose.msra.mxu0 %v525
    %809 = vmatprep.subr.mxu0 %v518
    %810 = vmatpush1.xpose.msra.mxu0 %v517
    %811 = vmatprep.subr.mxu0 %v510
    %812 = vmatpush1.xpose.msra.mxu0 %v509
    %813 = vmatprep.subr.mxu0 %v502
    %814 = vmatpush1.xpose.msra.mxu0 %v501
    %815 = vmatprep.subr.mxu0 0.0
    %816 = vmatpush2.xpose.msra.mxu0 0.0
    %817 = vmatprep.subr.mxu0 0.0
    %818 = vmatpush2.xpose.msra.mxu0 0.0
    %819 = vmatprep.subr.mxu0 0.0
    %820 = vmatpush2.xpose.msra.mxu0 0.0
    %821 = vmatprep.subr.mxu0 0.0
    %822 = vmatpush2.xpose.msra.mxu0 0.0
    %823 = vmatprep.subr.mxu0 0.0
    %824 = vmatpush2.xpose.msra.mxu0 0.0
    %825 = vmatprep.subr.mxu0 0.0
    %826 = vmatpush2.xpose.msra.mxu0 0.0
    %827 = vmatprep.subr.mxu0 0.0
    %828 = vmatpush2.xpose.msra.mxu0 0.0
    %829 = vmatprep.subr.mxu0 0.0
    %830 = vmatpush2.xpose.msra.mxu0 0.0
    %831 = vmatprep.subr.mxu0 0.0
    %832 = vmatpush2.xpose.msra.mxu0 0.0
    %833 = vmatprep.subr.mxu0 0.0
    %834 = vmatpush2.xpose.msra.mxu0 0.0
    %835 = vmatprep.subr.mxu0 0.0
    %836 = vmatpush2.xpose.msra.mxu0 0.0
    %837 = vmatprep.subr.mxu0 0.0
    %838 = vmatpush2.xpose.msra.mxu0 0.0
    %839 = vmatprep.subr.mxu0 0.0
    %840 = vmatpush2.xpose.msra.mxu0 0.0
    %841 = vmatprep.subr.mxu0 0.0
    %842 = vmatpush2.xpose.msra.mxu0 0.0
    %843 = vmatprep.subr.mxu0 0.0
    %844 = vmatpush2.xpose.msra.mxu0 0.0
    %845 = vmatprep.subr.mxu0 0.0
    %846 = vmatpush2.xpose.msra.mxu0 0.0
    %847 = vmatprep.mubr.f32.mxu0 %v572
    %848 = vmatmul.mubr.f32.gmra.mxu0 %v571
    %v849 = vpop.f32.mrf.mxu0
    %v850 = vadd.f32 %v780, %v849
    %v851 = vpop.f32.mrf.mxu0
    %852 = vdwg.mxu0
    %v853 = vld [vmem:[%s3] sm:$0xff]
    %v854 = vld [vmem:[%s3 + $0x8] sm:$0xff]
    %v855 = vld [vmem:[%s3 + $0x10] sm:$0xff]
    %v856 = vld [vmem:[%s3 + $0x18] sm:$0xff]
    %v857 = vld [vmem:[%s4] sm:$0x1]
    %v859 = vlaneseq
    %v860 = vshrl.u32 %v859, 7
    %v861 = vsub.s32 0, %v860
    %v862 = vrot.slane %v857, %v861
    %vm864 = vcmask 261120
    %v866 = vsel %vm864, %v850, 0
    %868 = vmatprep.subr.mxu0 0.0
    %869 = vmatpush1.msra.mxu0 0.0
    %870 = vmatprep.subr.mxu0 0.0
    %871 = vmatpush1.msra.mxu0 0.0
    %872 = vmatprep.subr.mxu0 0.0
    %873 = vmatpush1.msra.mxu0 0.0
    %874 = vmatprep.subr.mxu0 0.0
    %875 = vmatpush1.msra.mxu0 0.0
    %876 = vmatprep.subr.mxu0 0.0
    %877 = vmatpush1.msra.mxu0 0.0
    %878 = vmatprep.subr.mxu0 0.0
    %879 = vmatpush1.msra.mxu0 0.0
    %880 = vmatprep.subr.mxu0 0.0
    %881 = vmatpush1.msra.mxu0 0.0
    %882 = vmatprep.subr.mxu0 0.0
    %883 = vmatpush1.msra.mxu0 0.0
    %884 = vmatprep.subr.mxu0 0.0
    %885 = vmatpush1.msra.mxu0 0.0
    %886 = vmatprep.subr.mxu0 0.0
    %887 = vmatpush1.msra.mxu0 0.0
    %888 = vmatprep.subr.mxu0 0.0
    %889 = vmatpush1.msra.mxu0 0.0
    %890 = vmatprep.subr.mxu0 0.0
    %891 = vmatpush1.msra.mxu0 0.0
    %892 = vmatprep.subr.mxu0 0.0
    %893 = vmatpush1.msra.mxu0 %v856
    %894 = vmatprep.subr.mxu0 0.0
    %895 = vmatpush1.msra.mxu0 %v855
    %896 = vmatprep.subr.mxu0 0.0
    %897 = vmatpush1.msra.mxu0 %v854
    %898 = vmatprep.subr.mxu0 0.0
    %899 = vmatpush1.msra.mxu0 %v853
    %900 = vmatprep.subr.mxu0 0.0
    %901 = vmatpush2.msra.mxu0 0.0
    %902 = vmatprep.subr.mxu0 0.0
    %903 = vmatpush2.msra.mxu0 0.0
    %904 = vmatprep.subr.mxu0 0.0
    %905 = vmatpush2.msra.mxu0 0.0
    %906 = vmatprep.subr.mxu0 0.0
    %907 = vmatpush2.msra.mxu0 0.0
    %908 = vmatprep.subr.mxu0 0.0
    %909 = vmatpush2.msra.mxu0 0.0
    %910 = vmatprep.subr.mxu0 0.0
    %911 = vmatpush2.msra.mxu0 0.0
    %912 = vmatprep.subr.mxu0 0.0
    %913 = vmatpush2.msra.mxu0 0.0
    %914 = vmatprep.subr.mxu0 0.0
    %915 = vmatpush2.msra.mxu0 0.0
    %916 = vmatprep.subr.mxu0 0.0
    %917 = vmatpush2.msra.mxu0 0.0
    %918 = vmatprep.subr.mxu0 0.0
    %919 = vmatpush2.msra.mxu0 0.0
    %920 = vmatprep.subr.mxu0 0.0
    %921 = vmatpush2.msra.mxu0 0.0
    %922 = vmatprep.subr.mxu0 0.0
    %923 = vmatpush2.msra.mxu0 0.0
    %924 = vmatprep.subr.mxu0 0.0
    %925 = vmatpush2.msra.mxu0 0.0
    %926 = vmatprep.subr.mxu0 0.0
    %927 = vmatpush2.msra.mxu0 0.0
    %928 = vmatprep.subr.mxu0 0.0
    %929 = vmatpush2.msra.mxu0 0.0
    %930 = vmatprep.subr.mxu0 0.0
    %931 = vmatpush2.msra.mxu0 0.0
    %932 = vmatprep.mubr.f32.mxu0 0.0
    %933 = vmatmul.mubr.f32.gmra.mxu0 %v866
    %v934 = vpop.f32.mrf.mxu0
    %v935 = vadd.f32 %v862, %v934
    %v936 = vpop.f32.mrf.mxu0
    %937 = vdwg.mxu0
    %vm938 = vcmp.ge.s32.totalorder %v528, 2
    %v939 = vsel %vm938, 0.0, 1.0
    %v940 = vsub.f32 1.0, %v939
    %v941 = vmul.f32 %v935, %v939
    %vm942 = vcmask 519168
    %v943 = vsel %vm942, %v941, 0.0
    %v944 = vrot.slane %v943, 4
    %v945 = vadd.f32 %v943, %v944
    %v946 = vrot.slane %v945, 2
    %v947 = vadd.f32 %v945, %v946
    %v948 = vrot.slane %v947, 1
    %v949 = vadd.f32 %v947, %v948
    %v950 = vmul.f32 %v949, 0.5
    %v951 = vmul.f32 %v935, %v940
    %v952 = vsel %vm942, %v951, 0.0
    %v953 = vrot.slane %v952, 4
    %v954 = vadd.f32 %v952, %v953
    %v955 = vrot.slane %v954, 2
    %v956 = vadd.f32 %v954, %v955
    %v957 = vrot.slane %v956, 1
    %v958 = vadd.f32 %v956, %v957
    %v959 = vmul.f32 %v958, 0.5
    %v960 = vsel %vm938, 1, 0
    %vm961 = vcmp.eq.s32.totalorder %v960, 1
    %v962 = vsel %vm961, %v959, %v950
    %v963 = vsub.f32 %v935, %v962
    %v964 = vmul.f32 %v963, %v963
    %v965 = vmul.f32 %v964, %v939
    %v966 = vsel %vm942, %v965, 0.0
    %v967 = vrot.slane %v966, 4
    %v968 = vadd.f32 %v966, %v967
    %v969 = vrot.slane %v968, 2
    %v970 = vadd.f32 %v968, %v969
    %v971 = vrot.slane %v970, 1
    %v972 = vadd.f32 %v970, %v971
    %v973 = vmul.f32 %v972, 0.5
    %v974 = vmul.f32 %v964, %v940
    %v975 = vsel %vm942, %v974, 0.0
    %v976 = vrot.slane %v975, 4
    %v977 = vadd.f32 %v975, %v976
    %v978 = vrot.slane %v977, 2
    %v979 = vadd.f32 %v977, %v978
    %v980 = vrot.slane %v979, 1
    %v981 = vadd.f32 %v979, %v980
    %v982 = vmul.f32 %v981, 0.5
    %v983 = vsel %vm961, %v982, %v973
    %v984 = vadd.f32 %v983, 1e-05
    %v985 = vrsqrt.pop %v984
    %v986 = vmul.f32 %v963, %v985
    %v987 = vld [vmem:[%s5] sm:$0x1]
    %v989 = vlaneseq
    %v990 = vshrl.u32 %v989, 7
    %v991 = vsub.s32 0, %v990
    %v992 = vrot.slane %v987, %v991
    %v994 = vmul.f32 %v986, %v992
    %v995 = vld [vmem:[%s6] sm:$0x1]
    %v997 = vlaneseq
    %v998 = vshrl.u32 %v997, 7
    %v999 = vsub.s32 0, %v998
    %v1000 = vrot.slane %v995, %v999
    %v1002 = vadd.f32 %v994, %v1000
    %v1003 = vmax.f32 %v1002, 0.0
    %v1004 = vld [vmem:[%s7] sm:$0xff]
    %v1005 = vld [vmem:[%s7 + $0x8] sm:$0xff]
    %v1006 = vld [vmem:[%s7 + $0x10] sm:$0xff]
    %v1007 = vld [vmem:[%s7 + $0x18] sm:$0xff]
    %v1008 = vld [vmem:[%s7 + $0x20] sm:$0xff]
    %v1009 = vld [vmem:[%s7 + $0x28] sm:$0xff]
    %v1010 = vld [vmem:[%s7 + $0x30] sm:$0xff]
    %v1011 = vld [vmem:[%s7 + $0x38] sm:$0xff]
    %v1012 = vld [vmem:[%s8] sm:$0x1]
    %v1014 = vlaneseq
    %v1015 = vshrl.u32 %v1014, 7
    %v1016 = vsub.s32 0, %v1015
    %v1017 = vrot.slane %v1012, %v1016
    %vm1019 = vcmask 523264
    %v1021 = vsel %vm1019, %v1003, 0
    %1023 = vmatprep.subr.mxu0 0.0
    %1024 = vmatpush1.msra.mxu0 0.0
    %1025 = vmatprep.subr.mxu0 0.0
    %1026 = vmatpush1.msra.mxu0 0.0
    %1027 = vmatprep.subr.mxu0 0.0
    %1028 = vmatpush1.msra.mxu0 0.0
    %1029 = vmatprep.subr.mxu0 0.0
    %1030 = vmatpush1.msra.mxu0 0.0
    %1031 = vmatprep.subr.mxu0 0.0
    %1032 = vmatpush1.msra.mxu0 0.0
    %1033 = vmatprep.subr.mxu0 0.0
    %1034 = vmatpush1.msra.mxu0 0.0
    %1035 = vmatprep.subr.mxu0 0.0
    %1036 = vmatpush1.msra.mxu0 0.0
    %1037 = vmatprep.subr.mxu0 0.0
    %1038 = vmatpush1.msra.mxu0 0.0
    %1039 = vmatprep.subr.mxu0 0.0
    %1040 = vmatpush1.msra.mxu0 %v1011
    %1041 = vmatprep.subr.mxu0 0.0
    %1042 = vmatpush1.msra.mxu0 %v1010
    %1043 = vmatprep.subr.mxu0 0.0
    %1044 = vmatpush1.msra.mxu0 %v1009
    %1045 = vmatprep.subr.mxu0 0.0
    %1046 = vmatpush1.msra.mxu0 %v1008
    %1047 = vmatprep.subr.mxu0 0.0
    %1048 = vmatpush1.msra.mxu0 %v1007
    %1049 = vmatprep.subr.mxu0 0.0
    %1050 = vmatpush1.msra.mxu0 %v1006
    %1051 = vmatprep.subr.mxu0 0.0
    %1052 = vmatpush1.msra.mxu0 %v1005
    %1053 = vmatprep.subr.mxu0 0.0
    %1054 = vmatpush1.msra.mxu0 %v1004
    %1055 = vmatprep.subr.mxu0 0.0
    %1056 = vmatpush2.msra.mxu0 0.0
    %1057 = vmatprep.subr.mxu0 0.0
    %1058 = vmatpush2.msra.mxu0 0.0
    %1059 = vmatprep.subr.mxu0 0.0
    %1060 = vmatpush2.msra.mxu0 0.0
    %1061 = vmatprep.subr.mxu0 0.0
    %1062 = vmatpush2.msra.mxu0 0.0
    %1063 = vmatprep.subr.mxu0 0.0
    %1064 = vmatpush2.msra.mxu0 0.0
    %1065 = vmatprep.subr.mxu0 0.0
    %1066 = vmatpush2.msra.mxu0 0.0
    %1067 = vmatprep.subr.mxu0 0.0
    %1068 = vmatpush2.msra.mxu0 0.0
    %1069 = vmatprep.subr.mxu0 0.0
    %1070 = vmatpush2.msra.mxu0 0.0
    %1071 = vmatprep.subr.mxu0 0.0
    %1072 = vmatpush2.msra.mxu0 0.0
    %1073 = vmatprep.subr.mxu0 0.0
    %1074 = vmatpush2.msra.mxu0 0.0
    %1075 = vmatprep.subr.mxu0 0.0
    %1076 = vmatpush2.msra.mxu0 0.0
    %1077 = vmatprep.subr.mxu0 0.0
    %1078 = vmatpush2.msra.mxu0 0.0
    %1079 = vmatprep.subr.mxu0 0.0
    %1080 = vmatpush2.msra.mxu0 0.0
    %1081 = vmatprep.subr.mxu0 0.0
    %1082 = vmatpush2.msra.mxu0 0.0
    %1083 = vmatprep.subr.mxu0 0.0
    %1084 = vmatpush2.msra.mxu0 0.0
    %1085 = vmatprep.subr.mxu0 0.0
    %1086 = vmatpush2.msra.mxu0 0.0
    %1087 = vmatprep.mubr.f32.mxu0 0.0
    %1088 = vmatmul.mubr.f32.gmra.mxu0 %v1021
    %v1089 = vpop.f32.mrf.mxu0
    %v1090 = vadd.f32 %v1017, %v1089
    %v1091 = vpop.f32.mrf.mxu0
    %1092 = vdwg.mxu0
    %v1093 = vmul.f32 %v1090, %v1090
    %vm1094 = vcmask 125952
    %v1095 = vsel %vm1094, %v1093, 0.0
    %1096 = vadd.xlane.f32.xlu0 %v1095
    %v1097 = vpop.xlane.xlu0 %1096
    %v1098 = vrsqrt.pop %v1097
    %v1099 = vmul.f32 %v1097, %v1098
    %vm1100 = vcmp.eq.f32.partialorder %v1097, inf
    %v1101 = vsel %vm1100, %v1097, %v1099
    %vm1102 = vcmp.eq.f32.partialorder %v1097, 0.0
    %v1103 = vand.u32 %v1097, 2147483648
    %v1104 = vsel %vm1102, %v1103, %v1101
    %v1105 = vmax.f32 %v1104, 1e-12
    %v1106 = vrcp.pop %v1105
    %v1107 = vmul.f32 %v1090, %v1106
    %vm1108 = vcmask 130048
    %v1110 = vsel %vm1108, %v1107, 0
    %1112 = vmatprep.subr.mxu0 0.0
    %1113 = vmatpush1.xpose.msra.mxu0 0.0
    %1114 = vmatprep.subr.mxu0 0.0
    %1115 = vmatpush1.xpose.msra.mxu0 0.0
    %1116 = vmatprep.subr.mxu0 0.0
    %1117 = vmatpush1.xpose.msra.mxu0 0.0
    %1118 = vmatprep.subr.mxu0 0.0
    %1119 = vmatpush1.xpose.msra.mxu0 0.0
    %1120 = vmatprep.subr.mxu0 0.0
    %1121 = vmatpush1.xpose.msra.mxu0 0.0
    %1122 = vmatprep.subr.mxu0 0.0
    %1123 = vmatpush1.xpose.msra.mxu0 0.0
    %1124 = vmatprep.subr.mxu0 0.0
    %1125 = vmatpush1.xpose.msra.mxu0 0.0
    %1126 = vmatprep.subr.mxu0 0.0
    %1127 = vmatpush1.xpose.msra.mxu0 0.0
    %1128 = vmatprep.subr.mxu0 0.0
    %1129 = vmatpush1.xpose.msra.mxu0 0.0
    %1130 = vmatprep.subr.mxu0 0.0
    %1131 = vmatpush1.xpose.msra.mxu0 0.0
    %1132 = vmatprep.subr.mxu0 0.0
    %1133 = vmatpush1.xpose.msra.mxu0 0.0
    %1134 = vmatprep.subr.mxu0 0.0
    %1135 = vmatpush1.xpose.msra.mxu0 0.0
    %1136 = vmatprep.subr.mxu0 0.0
    %1137 = vmatpush1.xpose.msra.mxu0 0.0
    %1138 = vmatprep.subr.mxu0 0.0
    %1139 = vmatpush1.xpose.msra.mxu0 0.0
    %1140 = vmatprep.subr.mxu0 0.0
    %1141 = vmatpush1.xpose.msra.mxu0 0.0
    %1142 = vmatprep.subr.mxu0 0.0
    %1143 = vmatpush1.xpose.msra.mxu0 %v1110
    %1144 = vmatprep.subr.mxu0 0.0
    %1145 = vmatpush2.xpose.msra.mxu0 0.0
    %1146 = vmatprep.subr.mxu0 0.0
    %1147 = vmatpush2.xpose.msra.mxu0 0.0
    %1148 = vmatprep.subr.mxu0 0.0
    %1149 = vmatpush2.xpose.msra.mxu0 0.0
    %1150 = vmatprep.subr.mxu0 0.0
    %1151 = vmatpush2.xpose.msra.mxu0 0.0
    %1152 = vmatprep.subr.mxu0 0.0
    %1153 = vmatpush2.xpose.msra.mxu0 0.0
    %1154 = vmatprep.subr.mxu0 0.0
    %1155 = vmatpush2.xpose.msra.mxu0 0.0
    %1156 = vmatprep.subr.mxu0 0.0
    %1157 = vmatpush2.xpose.msra.mxu0 0.0
    %1158 = vmatprep.subr.mxu0 0.0
    %1159 = vmatpush2.xpose.msra.mxu0 0.0
    %1160 = vmatprep.subr.mxu0 0.0
    %1161 = vmatpush2.xpose.msra.mxu0 0.0
    %1162 = vmatprep.subr.mxu0 0.0
    %1163 = vmatpush2.xpose.msra.mxu0 0.0
    %1164 = vmatprep.subr.mxu0 0.0
    %1165 = vmatpush2.xpose.msra.mxu0 0.0
    %1166 = vmatprep.subr.mxu0 0.0
    %1167 = vmatpush2.xpose.msra.mxu0 0.0
    %1168 = vmatprep.subr.mxu0 0.0
    %1169 = vmatpush2.xpose.msra.mxu0 0.0
    %1170 = vmatprep.subr.mxu0 0.0
    %1171 = vmatpush2.xpose.msra.mxu0 0.0
    %1172 = vmatprep.subr.mxu0 0.0
    %1173 = vmatpush2.xpose.msra.mxu0 0.0
    %1174 = vmatprep.subr.mxu0 0.0
    %1175 = vmatpush2.xpose.msra.mxu0 0.0
    %1176 = vmatprep.mubr.f32.mxu0 0.0
    %1177 = vmatmul.mubr.f32.gmra.mxu0 %v1110
    %v1178 = vpop.f32.mrf.mxu0
    %v1179 = vadd.f32 0.0, %v1178
    %v1180 = vpop.f32.mrf.mxu0
    %1181 = vdwg.mxu0
    %vm1182 = vcmp.eq.s32.totalorder %v528, %v530
    %v1183 = vsel %vm1182, -1e+09, %v1179
    %vm1184 = vcmask 27648
    %v1185 = vsel %vm1184, %v1183, -inf
    %1186 = vmax.xlane.f32.xlu0 %v1185
    %v1187 = vpop.xlane.xlu0 %1186
    %v1188 = vsub.f32 %v1183, %v1187
    %v1189 = vmul.f32 %v1188, 1.442695
    %v1190 = vpow.pop %v1189
    %v1191 = vsel %vm1184, %v1190, 0.0
    %1192 = vadd.xlane.f32.xlu0 %v1191
    %v1193 = vpop.xlane.xlu0 %1192
    %v1194 = vlog2.pop %v1193
    %v1195 = vmul.f32 %v1194, 0.6931472
    %v1196 = vadd.f32 %v1187, %v1195
    %v1197 = vsub.f32 %v1183, %v1196
    %v1198 = vadd.s32 %v528, 2
    %vm1199 = vcmp.ge.s32.totalorder %v1198, 4
    %v1200 = vsub.s32 %v1198, 4
    %v1201 = vsel %vm1199, %v1200, %v1198
    %vm1202 = vcmp.eq.s32.totalorder %v530, %v1201
    %v1203 = vsel %vm1202, %v1197, 0.0
    %v1204 = vsel %vm1184, %v1203, 0.0
    %1205 = vadd.xlane.f32.xlu0 %v1204
    %v1206 = vpop.xlane.xlu0 %1205
    %v1207 = vrot.slane %v1206, 4
    %v1208 = vadd.f32 %v1206, %v1207
    %v1209 = vrot.slane %v1208, 2
    %v1210 = vadd.f32 %v1208, %v1209
    %v1211 = vrot.slane %v1210, 1
    %v1212 = vadd.f32 %v1210, %v1211
    %s1213 = vtos %v1212
    %s1214 = sadd.f32 %s1213, 0.0
    %s1215 = ssub.f32 0.0, %s1214
    %v1216 = vrcp.pop 4.0
    %s1217 = vtos %v1216
    %s1218 = smul.f32 %s1215, %s1217
    %s1219 = scalar_lea.smem [#allocation2], 0
    %1220 = sst [smem:[%s1219]] %s1218
    // Predicated region
    $region38: #{simclr_forward.1} parent=1 // pred_check
      _
    $region39: #{simclr_forward.1} parent=1 // pred_check_branch
      %1222 = sbr.rel (0) target = $region41
    $region40: #{simclr_forward.1} parent=1 // pred_region
      %s1224 = ssub.s32 16, 16
      %1225 = vsyncadd [#allocation3], %s1224
      %1228 = dma.smem_to_hbm [#allocation2], 16, %s9, [#allocation3]
    $region41: #{simclr_forward.1} parent=1 // pred_fallthru
      _
    // Predicated region
    $region42: #{simclr_forward.1} parent=1 // pred_check
      _
    $region43: #{simclr_forward.1} parent=1 // pred_check_branch
      %1230 = sbr.rel (0) target = $region45
    $region44: #{simclr_forward.1} parent=1 // pred_region
      %1231 = dma.done [#allocation3], 16
    $region45: #{simclr_forward.1} parent=1 // pred_fallthru
      _
    %1232 = sfence
    %1233 = vsyncpa [#allocation3], 1

</llo_original>
